<compile_context>
chip_gen: v5e
topology: v5e:2x2
jax: 0.10.0
libtpu: 0.0.40
codegen_flags: <defaults>
</compile_context>

<pallas_src>
import functools

import jax
import jax.numpy as jnp
from jax import lax
from jax.experimental import pallas as pl
from jax.experimental.pallas import tpu as pltpu


def _gradient_loss_kernel(gen_ref, gt_ref, out_ref, *, tn, n_planes, h, w):
    """Sums |dx(gt)-dx(gen)| + |dy(gt)-dy(gen)| over one block of planes."""
    i = pl.program_id(0)

    gen = gen_ref[...].astype(jnp.float32)   # (tn, h, w)
    gt = gt_ref[...].astype(jnp.float32)

    # Plane-validity mask for the ragged tail of the last block.
    plane_ids = i * tn + lax.broadcasted_iota(jnp.int32, (tn, 1, 1), 0)
    valid = plane_ids < n_planes             # (tn, 1, 1) bool

    def masked_sum(x):
        return jnp.sum(jnp.where(valid, x, 0.0))

    total = jnp.float32(0.0)

    # --- x-gradient (along w), right zero-pad -----------------------------
    if w > 1:
        gen_dx = jnp.abs(gen[:, :, 1:] - gen[:, :, : w - 1])
        gt_dx = jnp.abs(gt[:, :, 1:] - gt[:, :, : w - 1])
        total += masked_sum(jnp.abs(gt_dx - gen_dx))
    # boundary column w-1: gradient is |x[:, :, w-1] - 0|
    total += masked_sum(
        jnp.abs(jnp.abs(gt[:, :, w - 1:]) - jnp.abs(gen[:, :, w - 1:])))

    # --- y-gradient (along h), bottom zero-pad ----------------------------
    if h > 1:
        gen_dy = jnp.abs(gen[:, 1:, :] - gen[:, : h - 1, :])
        gt_dy = jnp.abs(gt[:, 1:, :] - gt[:, : h - 1, :])
        total += masked_sum(jnp.abs(gt_dy - gen_dy))
    # boundary row h-1: gradient is |x[:, h-1, :] - 0|
    total += masked_sum(
        jnp.abs(jnp.abs(gt[:, h - 1:, :]) - jnp.abs(gen[:, h - 1:, :])))

    out_ref[0, 0] = total


def _auto_block_planes(n, h, w):
    # ~512 KiB of f32 per input per grid step: big enough to amortize the
    # ~0.35 us/step grid overhead, small enough for v5e's 16 MiB scoped VMEM
    # default and v7x's 64 MiB physical VMEM with headroom for intermediates.
    target_elems = 128 * 1024
    return max(1, min(n, target_elems // max(1, h * w)))


@functools.partial(jax.jit, static_argnames=("block_planes",))
def gradient_loss(gen_frames, gt_frames, block_planes=None):
    """Equivalent of Gradient_Loss.forward(gen_frames, gt_frames)."""
    b, t, c, h, w = gen_frames.shape
    n = b * t * c
    # Collapse leading dims only (free reshape, no HBM copy); keep input dtype.
    gen = gen_frames.reshape(n, h, w)
    gt = gt_frames.reshape(n, h, w)

    tn = block_planes if block_planes is not None else _auto_block_planes(n, h, w)
    tn = max(1, min(tn, n))
    num_blocks = (n + tn - 1) // tn

    partials = pl.pallas_call(
        functools.partial(_gradient_loss_kernel, tn=tn, n_planes=n, h=h, w=w),
        out_shape=jax.ShapeDtypeStruct((num_blocks, 1), jnp.float32),
        grid_spec=pltpu.PrefetchScalarGridSpec(
            num_scalar_prefetch=0,
            grid=(num_blocks,),
            in_specs=[
                pl.BlockSpec((tn, h, w), lambda i: (i, 0, 0)),
                pl.BlockSpec((tn, h, w), lambda i: (i, 0, 0)),
            ],
            out_specs=pl.BlockSpec(
                (1, 1), lambda i: (i, 0), memory_space=pltpu.SMEM),
        ),
        compiler_params=pltpu.CompilerParams(
            dimension_semantics=("parallel",)),
    )(gen, gt)

    return jnp.sum(partials) / jnp.float32(n * h * w)


if __name__ == "__main__":
    key = jax.random.PRNGKey(0)
    k_gen, k_gt = jax.random.split(key)
    # (b, t, c, h, w) video-prediction style inputs.
    b, t, c, h, w = 2, 3, 4, 16, 16
    gen = jax.random.normal(k_gen, (b, t, c, h, w), dtype=jnp.float32)
    gt = jax.random.normal(k_gt, (b, t, c, h, w), dtype=jnp.float32)

    # Auto-tiled path (single block for this small input).
    loss = gradient_loss(gen, gt)
    jax.block_until_ready(loss)

    # Multi-block path with a ragged tail (24 planes, blocks of 7).
    loss_tail = gradient_loss(gen, gt, block_planes=7)
    jax.block_until_ready(loss_tail)

    # Pure-JAX reference (mirrors the PyTorch conv-with-identity-filters).
    g = gen.reshape(-1, h, w)
    r = gt.reshape(-1, h, w)

    def _dxdy(x):
        nx_w = jnp.pad(x, ((0, 0), (0, 0), (0, 1)))[:, :, 1:]
        nx_h = jnp.pad(x, ((0, 0), (0, 1), (0, 0)))[:, 1:, :]
        return jnp.abs(nx_w - x), jnp.abs(nx_h - x)

    g_dx, g_dy = _dxdy(g)
    r_dx, r_dy = _dxdy(r)
    ref = jnp.mean(jnp.abs(r_dx - g_dx) + jnp.abs(r_dy - g_dy))

    assert jnp.allclose(loss, ref, rtol=1e-5, atol=1e-5), (loss, ref)
    assert jnp.allclose(loss_tail, ref, rtol=1e-5, atol=1e-5), (loss_tail, ref)

    print("KERNEL_OK")
</pallas_src>

<mosaic_0001>
module attributes {stable_mosaic.version = 11 : i64} {
  func.func @_gradient_loss_kernel(%arg0: i32, %arg1: memref<24x16x16xf32, #tpu.memory_space<vmem>>, %arg2: memref<24x16x16xf32, #tpu.memory_space<vmem>>, %arg3: memref<1x1xf32, #tpu.memory_space<smem>>) attributes {dimension_semantics = [#tpu.dimension_semantics<parallel>], iteration_bounds = array<i64: 1>, scalar_prefetch = 0 : i64, scratch_operands = 0 : i64, tpu.core_type = #tpu.core_type<tc>, window_params = [{transform_indices = @transform_0, window_bounds = array<i64: 24, 16, 16>}, {transform_indices = @transform_1, window_bounds = array<i64: 24, 16, 16>}, {transform_indices = @transform_2, window_bounds = array<i64: 1, 1>}]} {
    %c0 = arith.constant 0 : index
    %c0_0 = arith.constant 0 : index
    %c0_1 = arith.constant 0 : index
    %0 = vector.load %arg1[%c0, %c0_0, %c0_1] : memref<24x16x16xf32, #tpu.memory_space<vmem>>, vector<24x16x16xf32>
    %c0_2 = arith.constant 0 : index
    %c0_3 = arith.constant 0 : index
    %c0_4 = arith.constant 0 : index
    %1 = vector.load %arg2[%c0_2, %c0_3, %c0_4] : memref<24x16x16xf32, #tpu.memory_space<vmem>>, vector<24x16x16xf32>
    %c24_i32 = arith.constant 24 : i32
    %2 = arith.muli %arg0, %c24_i32 : i32
    %3 = tpu.iota {dimensions = array<i32: 0>} : vector<24x1x1xi32>
    %4 = vector.broadcast %2 : i32 to vector<24x1x1xi32>
    %5 = arith.addi %4, %3 : vector<24x1x1xi32>
    %c24_i32_5 = arith.constant 24 : i32
    %6 = vector.broadcast %c24_i32_5 : i32 to vector<24x1x1xi32>
    %7 = arith.cmpi slt, %5, %6 : vector<24x1x1xi32>
    %8 = vector.extract_strided_slice %0 {offsets = [0, 0, 1], sizes = [24, 16, 15], strides = [1, 1, 1]} : vector<24x16x16xf32> to vector<24x16x15xf32>
    %9 = vector.extract_strided_slice %0 {offsets = [0, 0, 0], sizes = [24, 16, 15], strides = [1, 1, 1]} : vector<24x16x16xf32> to vector<24x16x15xf32>
    %10 = arith.subf %8, %9 : vector<24x16x15xf32>
    %11 = math.absf %10 : vector<24x16x15xf32>
    %12 = vector.extract_strided_slice %1 {offsets = [0, 0, 1], sizes = [24, 16, 15], strides = [1, 1, 1]} : vector<24x16x16xf32> to vector<24x16x15xf32>
    %13 = vector.extract_strided_slice %1 {offsets = [0, 0, 0], sizes = [24, 16, 15], strides = [1, 1, 1]} : vector<24x16x16xf32> to vector<24x16x15xf32>
    %14 = arith.subf %12, %13 : vector<24x16x15xf32>
    %15 = math.absf %14 : vector<24x16x15xf32>
    %16 = arith.subf %15, %11 : vector<24x16x15xf32>
    %17 = math.absf %16 : vector<24x16x15xf32>
    %cst = arith.constant 0.000000e+00 : f32
    %18 = vector.shape_cast %7 : vector<24x1x1xi1> to vector<24x1x1xi1>
    %19 = vector.broadcast %18 : vector<24x1x1xi1> to vector<24x16x15xi1>
    %20 = vector.broadcast %cst : f32 to vector<24x16x15xf32>
    %21 = arith.select %19, %17, %20 : vector<24x16x15xi1>, vector<24x16x15xf32>
    %22 = vector.shape_cast %21 : vector<24x16x15xf32> to vector<1x24x16x15xf32>
    %cst_6 = arith.constant dense<0.000000e+00> : vector<1xf32>
    %23 = vector.multi_reduction <add>, %22, %cst_6 [1, 2, 3] : vector<1x24x16x15xf32> to vector<1xf32>
    %24 = vector.shape_cast %23 : vector<1xf32> to vector<1x1x1x1xf32>
    %25 = vector.extract %24[0, 0, 0, 0] : f32 from vector<1x1x1x1xf32>
    %cst_7 = arith.constant 0.000000e+00 : f32
    %26 = arith.addf %cst_7, %25 : f32
    %27 = vector.extract_strided_slice %1 {offsets = [0, 0, 15], sizes = [24, 16, 1], strides = [1, 1, 1]} : vector<24x16x16xf32> to vector<24x16x1xf32>
    %28 = math.absf %27 : vector<24x16x1xf32>
    %29 = vector.extract_strided_slice %0 {offsets = [0, 0, 15], sizes = [24, 16, 1], strides = [1, 1, 1]} : vector<24x16x16xf32> to vector<24x16x1xf32>
    %30 = math.absf %29 : vector<24x16x1xf32>
    %31 = arith.subf %28, %30 : vector<24x16x1xf32>
    %32 = math.absf %31 : vector<24x16x1xf32>
    %cst_8 = arith.constant 0.000000e+00 : f32
    %33 = vector.shape_cast %7 : vector<24x1x1xi1> to vector<24x1x1xi1>
    %34 = vector.broadcast %33 : vector<24x1x1xi1> to vector<24x16x1xi1>
    %35 = vector.broadcast %cst_8 : f32 to vector<24x16x1xf32>
    %36 = arith.select %34, %32, %35 : vector<24x16x1xi1>, vector<24x16x1xf32>
    %37 = vector.shape_cast %36 : vector<24x16x1xf32> to vector<1x24x16x1xf32>
    %cst_9 = arith.constant dense<0.000000e+00> : vector<1xf32>
    %38 = vector.multi_reduction <add>, %37, %cst_9 [1, 2, 3] : vector<1x24x16x1xf32> to vector<1xf32>
    %39 = vector.shape_cast %38 : vector<1xf32> to vector<1x1x1x1xf32>
    %40 = vector.extract %39[0, 0, 0, 0] : f32 from vector<1x1x1x1xf32>
    %41 = arith.addf %26, %40 : f32
    %42 = vector.extract_strided_slice %0 {offsets = [0, 1, 0], sizes = [24, 15, 16], strides = [1, 1, 1]} : vector<24x16x16xf32> to vector<24x15x16xf32>
    %43 = vector.extract_strided_slice %0 {offsets = [0, 0, 0], sizes = [24, 15, 16], strides = [1, 1, 1]} : vector<24x16x16xf32> to vector<24x15x16xf32>
    %44 = arith.subf %42, %43 : vector<24x15x16xf32>
    %45 = math.absf %44 : vector<24x15x16xf32>
    %46 = vector.extract_strided_slice %1 {offsets = [0, 1, 0], sizes = [24, 15, 16], strides = [1, 1, 1]} : vector<24x16x16xf32> to vector<24x15x16xf32>
    %47 = vector.extract_strided_slice %1 {offsets = [0, 0, 0], sizes = [24, 15, 16], strides = [1, 1, 1]} : vector<24x16x16xf32> to vector<24x15x16xf32>
    %48 = arith.subf %46, %47 : vector<24x15x16xf32>
    %49 = math.absf %48 : vector<24x15x16xf32>
    %50 = arith.subf %49, %45 : vector<24x15x16xf32>
    %51 = math.absf %50 : vector<24x15x16xf32>
    %cst_10 = arith.constant 0.000000e+00 : f32
    %52 = vector.shape_cast %7 : vector<24x1x1xi1> to vector<24x1x1xi1>
    %53 = vector.broadcast %52 : vector<24x1x1xi1> to vector<24x15x16xi1>
    %54 = vector.broadcast %cst_10 : f32 to vector<24x15x16xf32>
    %55 = arith.select %53, %51, %54 : vector<24x15x16xi1>, vector<24x15x16xf32>
    %56 = vector.shape_cast %55 : vector<24x15x16xf32> to vector<1x24x15x16xf32>
    %cst_11 = arith.constant dense<0.000000e+00> : vector<1xf32>
    %57 = vector.multi_reduction <add>, %56, %cst_11 [1, 2, 3] : vector<1x24x15x16xf32> to vector<1xf32>
    %58 = vector.shape_cast %57 : vector<1xf32> to vector<1x1x1x1xf32>
    %59 = vector.extract %58[0, 0, 0, 0] : f32 from vector<1x1x1x1xf32>
    %60 = arith.addf %41, %59 : f32
    %61 = vector.extract_strided_slice %1 {offsets = [0, 15, 0], sizes = [24, 1, 16], strides = [1, 1, 1]} : vector<24x16x16xf32> to vector<24x1x16xf32>
    %62 = math.absf %61 : vector<24x1x16xf32>
    %63 = vector.extract_strided_slice %0 {offsets = [0, 15, 0], sizes = [24, 1, 16], strides = [1, 1, 1]} : vector<24x16x16xf32> to vector<24x1x16xf32>
    %64 = math.absf %63 : vector<24x1x16xf32>
    %65 = arith.subf %62, %64 : vector<24x1x16xf32>
    %66 = math.absf %65 : vector<24x1x16xf32>
    %cst_12 = arith.constant 0.000000e+00 : f32
    %67 = vector.shape_cast %7 : vector<24x1x1xi1> to vector<24x1x1xi1>
    %68 = vector.broadcast %67 : vector<24x1x1xi1> to vector<24x1x16xi1>
    %69 = vector.broadcast %cst_12 : f32 to vector<24x1x16xf32>
    %70 = arith.select %68, %66, %69 : vector<24x1x16xi1>, vector<24x1x16xf32>
    %71 = vector.shape_cast %70 : vector<24x1x16xf32> to vector<1x24x1x16xf32>
    %cst_13 = arith.constant dense<0.000000e+00> : vector<1xf32>
    %72 = vector.multi_reduction <add>, %71, %cst_13 [1, 2, 3] : vector<1x24x1x16xf32> to vector<1xf32>
    %73 = vector.shape_cast %72 : vector<1xf32> to vector<1x1x1x1xf32>
    %74 = vector.extract %73[0, 0, 0, 0] : f32 from vector<1x1x1x1xf32>
    %75 = arith.addf %60, %74 : f32
    %c0_14 = arith.constant 0 : index
    %c0_15 = arith.constant 0 : index
    %76 = memref.load %arg3[%c0_14, %c0_15] : memref<1x1xf32, #tpu.memory_space<smem>>
    memref.store %75, %arg3[%c0_14, %c0_15] : memref<1x1xf32, #tpu.memory_space<smem>>
    return
  }
  func.func @transform_0(%arg0: i32) -> (i32, i32, i32) {
    %c0_i32 = arith.constant 0 : i32
    %c0_i32_0 = arith.constant 0 : i32
    %c0_i32_1 = arith.constant 0 : i32
    return %arg0, %c0_i32, %c0_i32_0 : i32, i32, i32
  }
  func.func @transform_1(%arg0: i32) -> (i32, i32, i32) {
    %c0_i32 = arith.constant 0 : i32
    %c0_i32_0 = arith.constant 0 : i32
    %c0_i32_1 = arith.constant 0 : i32
    return %arg0, %c0_i32, %c0_i32_0 : i32, i32, i32
  }
  func.func @transform_2(%arg0: i32) -> (i32, i32) {
    %c0_i32 = arith.constant 0 : i32
    %c0_i32_0 = arith.constant 0 : i32
    return %arg0, %c0_i32 : i32, i32
  }
}

</mosaic_0001>

<llo_original>
// kernel: gradient_loss.1
$region0: #{gradient_loss.1}
  #allocation0 [shape = 'u32[]', space=smem, size = 0x4, offset = 0x4, fixed_abs, tag = 'smem constant byte address 0x4 - core index']
  #allocation1 [shape = 'u32[72,128]{1,0:T(1,128)}', space=vmem, size = 0x9000, scoped, tag = 'internal scratch']
  %s0 = inlined_call_operand.hbm [shape: f32[24,16,16], index: 0, kind: input, shape index: {}]
  %s1 = inlined_call_operand.hbm [shape: f32[24,16,16], index: 1, kind: input, shape index: {}]
  %s2 = inlined_call_operand.hbm [shape: f32[1,1], index: 2, kind: output, shape index: {}]
  %s3 = sld [smem:[#allocation0]]
  $region26: #{gradient_loss.1} parent=0
    _
  %s5 = ssub.s32 1, %s3
  %s6 = scalar_select 0, %s5, %s3
  $region1: #{gradient_loss.1} parent=0
    #allocation2 [shape = 'u8[196608]{0}', space=vmem, size = 0x30000, scoped, tag = 'input window, operand 0, single buffered']
    #allocation3 [shape = 's32[1]{0}', space=sflag, size = 0x4, scoped, tag = 'scoped memory for gradient_loss.1']
    #allocation4 [shape = 's32[1]{0}', space=sflag, size = 0x4, scoped, tag = 'scoped memory for gradient_loss.1']
    #allocation5 [shape = 'u8[196608]{0}', space=vmem, size = 0x30000, scoped, tag = 'input window, operand 1, single buffered']
    #allocation6 [shape = 's32[1]{0}', space=sflag, size = 0x4, scoped, tag = 'scoped memory for gradient_loss.1']
    #allocation7 [shape = 'u8[512]{0}', space=smem, size = 0x200, scoped, tag = 'output window, operand 0, single buffered']
    %7 = vsyncpa [#allocation3], 0
    %8 = vsyncpa [#allocation6], 0
    %9 = vsyncpa [#allocation4], 0
    // Predicated region
    $region2: #{gradient_loss.1} parent=1 // pred_check
      _
    $region3: #{gradient_loss.1} parent=1 // pred_check_branch
      %11 = sbr.rel (0) target = $region5
    $region4: #{gradient_loss.1} parent=1 // pred_region
      %13 = vsyncadd [#allocation3], 0
      %s14 = sshll.u32 %s0, 4
      %s15 = int_to_ptr.hbm [resolvable:$true] %s14
      %s16 = sshll.u32 [#allocation2], 4
      %s17 = int_to_ptr.vmem [resolvable:$true] %s16
      %22 = dma.hbm_to_vmem [thread:$0]  %s15, 6144, %s17, [#allocation3], 128, 128, 8
    $region5: #{gradient_loss.1} parent=1 // pred_fallthru
      _
    // Predicated region
    $region6: #{gradient_loss.1} parent=1 // pred_check
      _
    $region7: #{gradient_loss.1} parent=1 // pred_check_branch
      %24 = sbr.rel (0) target = $region9
    $region8: #{gradient_loss.1} parent=1 // pred_region
      %26 = vsyncadd [#allocation6], 0
      %s27 = sshll.u32 %s1, 4
      %s28 = int_to_ptr.hbm [resolvable:$true] %s27
      %s29 = sshll.u32 [#allocation5], 4
      %s30 = int_to_ptr.vmem [resolvable:$true] %s29
      %35 = dma.hbm_to_vmem [thread:$0]  %s28, 6144, %s30, [#allocation6], 128, 128, 8
    $region9: #{gradient_loss.1} parent=1 // pred_fallthru
      _
    // Predicated region
    $region10: #{gradient_loss.1} parent=1 // pred_check
      _
    $region11: #{gradient_loss.1} parent=1 // pred_check_branch
      %37 = sbr.rel (0) target = $region13
    $region12: #{gradient_loss.1} parent=1 // pred_region
      %39 = dma.done [#allocation3], 6144
    $region13: #{gradient_loss.1} parent=1 // pred_fallthru
      _
    // Predicated region
    $region14: #{gradient_loss.1} parent=1 // pred_check
      _
    $region15: #{gradient_loss.1} parent=1 // pred_check_branch
      %41 = sbr.rel (0) target = $region17
    $region16: #{gradient_loss.1} parent=1 // pred_region
      %43 = dma.done [#allocation6], 6144
    $region17: #{gradient_loss.1} parent=1 // pred_fallthru
      _
    %v44 = vld [vmem:[#allocation2] sm:$0xff]
    %v45 = vld [vmem:[#allocation2 + $0x8] sm:$0xff]
    %v46 = vld [vmem:[#allocation2 + $0x10] sm:$0xff]
    %v47 = vld [vmem:[#allocation2 + $0x18] sm:$0xff]
    %v48 = vld [vmem:[#allocation2 + $0x20] sm:$0xff]
    %v49 = vld [vmem:[#allocation2 + $0x28] sm:$0xff]
    %v50 = vld [vmem:[#allocation2 + $0x30] sm:$0xff]
    %v51 = vld [vmem:[#allocation2 + $0x38] sm:$0xff]
    %v52 = vld [vmem:[#allocation2 + $0x40] sm:$0xff]
    %v53 = vld [vmem:[#allocation2 + $0x48] sm:$0xff]
    %v54 = vld [vmem:[#allocation2 + $0x50] sm:$0xff]
    %v55 = vld [vmem:[#allocation2 + $0x58] sm:$0xff]
    %v56 = vld [vmem:[#allocation2 + $0x60] sm:$0xff]
    %v57 = vld [vmem:[#allocation2 + $0x68] sm:$0xff]
    %v58 = vld [vmem:[#allocation2 + $0x70] sm:$0xff]
    %v59 = vld [vmem:[#allocation2 + $0x78] sm:$0xff]
    %v60 = vld [vmem:[#allocation2 + $0x80] sm:$0xff]
    %v61 = vld [vmem:[#allocation2 + $0x88] sm:$0xff]
    %v62 = vld [vmem:[#allocation2 + $0x90] sm:$0xff]
    %v63 = vld [vmem:[#allocation2 + $0x98] sm:$0xff]
    %v64 = vld [vmem:[#allocation2 + $0xa0] sm:$0xff]
    %v65 = vld [vmem:[#allocation2 + $0xa8] sm:$0xff]
    %v66 = vld [vmem:[#allocation2 + $0xb0] sm:$0xff]
    %v67 = vld [vmem:[#allocation2 + $0xb8] sm:$0xff]
    %v68 = vld [vmem:[#allocation2 + $0xc0] sm:$0xff]
    %v69 = vld [vmem:[#allocation2 + $0xc8] sm:$0xff]
    %v70 = vld [vmem:[#allocation2 + $0xd0] sm:$0xff]
    %v71 = vld [vmem:[#allocation2 + $0xd8] sm:$0xff]
    %v72 = vld [vmem:[#allocation2 + $0xe0] sm:$0xff]
    %v73 = vld [vmem:[#allocation2 + $0xe8] sm:$0xff]
    %v74 = vld [vmem:[#allocation2 + $0xf0] sm:$0xff]
    %v75 = vld [vmem:[#allocation2 + $0xf8] sm:$0xff]
    %v76 = vld [vmem:[#allocation2 + $0x100] sm:$0xff]
    %v77 = vld [vmem:[#allocation2 + $0x108] sm:$0xff]
    %v78 = vld [vmem:[#allocation2 + $0x110] sm:$0xff]
    %v79 = vld [vmem:[#allocation2 + $0x118] sm:$0xff]
    %v80 = vld [vmem:[#allocation2 + $0x120] sm:$0xff]
    %v81 = vld [vmem:[#allocation2 + $0x128] sm:$0xff]
    %v82 = vld [vmem:[#allocation2 + $0x130] sm:$0xff]
    %v83 = vld [vmem:[#allocation2 + $0x138] sm:$0xff]
    %v84 = vld [vmem:[#allocation2 + $0x140] sm:$0xff]
    %v85 = vld [vmem:[#allocation2 + $0x148] sm:$0xff]
    %v86 = vld [vmem:[#allocation2 + $0x150] sm:$0xff]
    %v87 = vld [vmem:[#allocation2 + $0x158] sm:$0xff]
    %v88 = vld [vmem:[#allocation2 + $0x160] sm:$0xff]
    %v89 = vld [vmem:[#allocation2 + $0x168] sm:$0xff]
    %v90 = vld [vmem:[#allocation2 + $0x170] sm:$0xff]
    %v91 = vld [vmem:[#allocation2 + $0x178] sm:$0xff]
    %v92 = vld [vmem:[#allocation5] sm:$0xff]
    %v93 = vld [vmem:[#allocation5 + $0x8] sm:$0xff]
    %v94 = vld [vmem:[#allocation5 + $0x10] sm:$0xff]
    %v95 = vld [vmem:[#allocation5 + $0x18] sm:$0xff]
    %v96 = vld [vmem:[#allocation5 + $0x20] sm:$0xff]
    %v97 = vld [vmem:[#allocation5 + $0x28] sm:$0xff]
    %v98 = vld [vmem:[#allocation5 + $0x30] sm:$0xff]
    %v99 = vld [vmem:[#allocation5 + $0x38] sm:$0xff]
    %v100 = vld [vmem:[#allocation5 + $0x40] sm:$0xff]
    %v101 = vld [vmem:[#allocation5 + $0x48] sm:$0xff]
    %v102 = vld [vmem:[#allocation5 + $0x50] sm:$0xff]
    %v103 = vld [vmem:[#allocation5 + $0x58] sm:$0xff]
    %v104 = vld [vmem:[#allocation5 + $0x60] sm:$0xff]
    %v105 = vld [vmem:[#allocation5 + $0x68] sm:$0xff]
    %v106 = vld [vmem:[#allocation5 + $0x70] sm:$0xff]
    %v107 = vld [vmem:[#allocation5 + $0x78] sm:$0xff]
    %v108 = vld [vmem:[#allocation5 + $0x80] sm:$0xff]
    %v109 = vld [vmem:[#allocation5 + $0x88] sm:$0xff]
    %v110 = vld [vmem:[#allocation5 + $0x90] sm:$0xff]
    %v111 = vld [vmem:[#allocation5 + $0x98] sm:$0xff]
    %v112 = vld [vmem:[#allocation5 + $0xa0] sm:$0xff]
    %v113 = vld [vmem:[#allocation5 + $0xa8] sm:$0xff]
    %v114 = vld [vmem:[#allocation5 + $0xb0] sm:$0xff]
    %v115 = vld [vmem:[#allocation5 + $0xb8] sm:$0xff]
    %v116 = vld [vmem:[#allocation5 + $0xc0] sm:$0xff]
    %v117 = vld [vmem:[#allocation5 + $0xc8] sm:$0xff]
    %v118 = vld [vmem:[#allocation5 + $0xd0] sm:$0xff]
    %v119 = vld [vmem:[#allocation5 + $0xd8] sm:$0xff]
    %v120 = vld [vmem:[#allocation5 + $0xe0] sm:$0xff]
    %v121 = vld [vmem:[#allocation5 + $0xe8] sm:$0xff]
    %v122 = vld [vmem:[#allocation5 + $0xf0] sm:$0xff]
    %v123 = vld [vmem:[#allocation5 + $0xf8] sm:$0xff]
    %v124 = vld [vmem:[#allocation5 + $0x100] sm:$0xff]
    %v125 = vld [vmem:[#allocation5 + $0x108] sm:$0xff]
    %v126 = vld [vmem:[#allocation5 + $0x110] sm:$0xff]
    %v127 = vld [vmem:[#allocation5 + $0x118] sm:$0xff]
    %v128 = vld [vmem:[#allocation5 + $0x120] sm:$0xff]
    %v129 = vld [vmem:[#allocation5 + $0x128] sm:$0xff]
    %v130 = vld [vmem:[#allocation5 + $0x130] sm:$0xff]
    %v131 = vld [vmem:[#allocation5 + $0x138] sm:$0xff]
    %v132 = vld [vmem:[#allocation5 + $0x140] sm:$0xff]
    %v133 = vld [vmem:[#allocation5 + $0x148] sm:$0xff]
    %v134 = vld [vmem:[#allocation5 + $0x150] sm:$0xff]
    %v135 = vld [vmem:[#allocation5 + $0x158] sm:$0xff]
    %v136 = vld [vmem:[#allocation5 + $0x160] sm:$0xff]
    %v137 = vld [vmem:[#allocation5 + $0x168] sm:$0xff]
    %v138 = vld [vmem:[#allocation5 + $0x170] sm:$0xff]
    %v139 = vld [vmem:[#allocation5 + $0x178] sm:$0xff]
    %s140 = smul.u32 0, 24
    %v141 = vstv %s140
    %v142 = vadd.s32 %v141, 1
    %v143 = vadd.s32 %v141, 2
    %v144 = vadd.s32 %v141, 3
    %v145 = vadd.s32 %v141, 4
    %v146 = vadd.s32 %v141, 5
    %v147 = vadd.s32 %v141, 6
    %v148 = vadd.s32 %v141, 7
    %v149 = vadd.s32 %v141, 8
    %v150 = vadd.s32 %v141, 9
    %v151 = vadd.s32 %v141, 10
    %v152 = vadd.s32 %v141, 11
    %v153 = vadd.s32 %v141, 12
    %v154 = vadd.s32 %v141, 13
    %v155 = vadd.s32 %v141, 14
    %v156 = vadd.s32 %v141, 15
    %v157 = vadd.s32 %v141, 16
    %v158 = vadd.s32 %v141, 17
    %v159 = vadd.s32 %v141, 18
    %v160 = vadd.s32 %v141, 19
    %v161 = vadd.s32 %v141, 20
    %v162 = vadd.s32 %v141, 21
    %v163 = vadd.s32 %v141, 22
    %v164 = vadd.s32 %v141, 23
    %vm165 = vcmp.lt.s32.totalorder %v141, 24
    %vm166 = vcmp.lt.s32.totalorder %v142, 24
    %vm167 = vcmp.lt.s32.totalorder %v143, 24
    %vm168 = vcmp.lt.s32.totalorder %v144, 24
    %vm169 = vcmp.lt.s32.totalorder %v145, 24
    %vm170 = vcmp.lt.s32.totalorder %v146, 24
    %vm171 = vcmp.lt.s32.totalorder %v147, 24
    %vm172 = vcmp.lt.s32.totalorder %v148, 24
    %vm173 = vcmp.lt.s32.totalorder %v149, 24
    %vm174 = vcmp.lt.s32.totalorder %v150, 24
    %vm175 = vcmp.lt.s32.totalorder %v151, 24
    %vm176 = vcmp.lt.s32.totalorder %v152, 24
    %vm177 = vcmp.lt.s32.totalorder %v153, 24
    %vm178 = vcmp.lt.s32.totalorder %v154, 24
    %vm179 = vcmp.lt.s32.totalorder %v155, 24
    %vm180 = vcmp.lt.s32.totalorder %v156, 24
    %vm181 = vcmp.lt.s32.totalorder %v157, 24
    %vm182 = vcmp.lt.s32.totalorder %v158, 24
    %vm183 = vcmp.lt.s32.totalorder %v159, 24
    %vm184 = vcmp.lt.s32.totalorder %v160, 24
    %vm185 = vcmp.lt.s32.totalorder %v161, 24
    %vm186 = vcmp.lt.s32.totalorder %v162, 24
    %vm187 = vcmp.lt.s32.totalorder %v163, 24
    %vm188 = vcmp.lt.s32.totalorder %v164, 24
    %237 = vrot.lane.b32.xlu0 %v44, 1
    %v238 = vpop.permute.xlu0 %237
    %239 = vrot.lane.b32.xlu0 %v45, 1
    %v240 = vpop.permute.xlu0 %239
    %241 = vrot.lane.b32.xlu0 %v46, 1
    %v242 = vpop.permute.xlu0 %241
    %243 = vrot.lane.b32.xlu0 %v47, 1
    %v244 = vpop.permute.xlu0 %243
    %245 = vrot.lane.b32.xlu0 %v48, 1
    %v246 = vpop.permute.xlu0 %245
    %247 = vrot.lane.b32.xlu0 %v49, 1
    %v248 = vpop.permute.xlu0 %247
    %249 = vrot.lane.b32.xlu0 %v50, 1
    %v250 = vpop.permute.xlu0 %249
    %251 = vrot.lane.b32.xlu0 %v51, 1
    %v252 = vpop.permute.xlu0 %251
    %253 = vrot.lane.b32.xlu0 %v52, 1
    %v254 = vpop.permute.xlu0 %253
    %255 = vrot.lane.b32.xlu0 %v53, 1
    %v256 = vpop.permute.xlu0 %255
    %257 = vrot.lane.b32.xlu0 %v54, 1
    %v258 = vpop.permute.xlu0 %257
    %259 = vrot.lane.b32.xlu0 %v55, 1
    %v260 = vpop.permute.xlu0 %259
    %261 = vrot.lane.b32.xlu0 %v56, 1
    %v262 = vpop.permute.xlu0 %261
    %263 = vrot.lane.b32.xlu0 %v57, 1
    %v264 = vpop.permute.xlu0 %263
    %265 = vrot.lane.b32.xlu0 %v58, 1
    %v266 = vpop.permute.xlu0 %265
    %267 = vrot.lane.b32.xlu0 %v59, 1
    %v268 = vpop.permute.xlu0 %267
    %269 = vrot.lane.b32.xlu0 %v60, 1
    %v270 = vpop.permute.xlu0 %269
    %271 = vrot.lane.b32.xlu0 %v61, 1
    %v272 = vpop.permute.xlu0 %271
    %273 = vrot.lane.b32.xlu0 %v62, 1
    %v274 = vpop.permute.xlu0 %273
    %275 = vrot.lane.b32.xlu0 %v63, 1
    %v276 = vpop.permute.xlu0 %275
    %277 = vrot.lane.b32.xlu0 %v64, 1
    %v278 = vpop.permute.xlu0 %277
    %279 = vrot.lane.b32.xlu0 %v65, 1
    %v280 = vpop.permute.xlu0 %279
    %281 = vrot.lane.b32.xlu0 %v66, 1
    %v282 = vpop.permute.xlu0 %281
    %283 = vrot.lane.b32.xlu0 %v67, 1
    %v284 = vpop.permute.xlu0 %283
    %285 = vrot.lane.b32.xlu0 %v68, 1
    %v286 = vpop.permute.xlu0 %285
    %287 = vrot.lane.b32.xlu0 %v69, 1
    %v288 = vpop.permute.xlu0 %287
    %289 = vrot.lane.b32.xlu0 %v70, 1
    %v290 = vpop.permute.xlu0 %289
    %291 = vrot.lane.b32.xlu0 %v71, 1
    %v292 = vpop.permute.xlu0 %291
    %293 = vrot.lane.b32.xlu0 %v72, 1
    %v294 = vpop.permute.xlu0 %293
    %295 = vrot.lane.b32.xlu0 %v73, 1
    %v296 = vpop.permute.xlu0 %295
    %297 = vrot.lane.b32.xlu0 %v74, 1
    %v298 = vpop.permute.xlu0 %297
    %299 = vrot.lane.b32.xlu0 %v75, 1
    %v300 = vpop.permute.xlu0 %299
    %301 = vrot.lane.b32.xlu0 %v76, 1
    %v302 = vpop.permute.xlu0 %301
    %303 = vrot.lane.b32.xlu0 %v77, 1
    %v304 = vpop.permute.xlu0 %303
    %305 = vrot.lane.b32.xlu0 %v78, 1
    %v306 = vpop.permute.xlu0 %305
    %307 = vrot.lane.b32.xlu0 %v79, 1
    %v308 = vpop.permute.xlu0 %307
    %309 = vrot.lane.b32.xlu0 %v80, 1
    %v310 = vpop.permute.xlu0 %309
    %311 = vrot.lane.b32.xlu0 %v81, 1
    %v312 = vpop.permute.xlu0 %311
    %313 = vrot.lane.b32.xlu0 %v82, 1
    %v314 = vpop.permute.xlu0 %313
    %315 = vrot.lane.b32.xlu0 %v83, 1
    %v316 = vpop.permute.xlu0 %315
    %317 = vrot.lane.b32.xlu0 %v84, 1
    %v318 = vpop.permute.xlu0 %317
    %319 = vrot.lane.b32.xlu0 %v85, 1
    %v320 = vpop.permute.xlu0 %319
    %321 = vrot.lane.b32.xlu0 %v86, 1
    %v322 = vpop.permute.xlu0 %321
    %323 = vrot.lane.b32.xlu0 %v87, 1
    %v324 = vpop.permute.xlu0 %323
    %325 = vrot.lane.b32.xlu0 %v88, 1
    %v326 = vpop.permute.xlu0 %325
    %327 = vrot.lane.b32.xlu0 %v89, 1
    %v328 = vpop.permute.xlu0 %327
    %329 = vrot.lane.b32.xlu0 %v90, 1
    %v330 = vpop.permute.xlu0 %329
    %331 = vrot.lane.b32.xlu0 %v91, 1
    %v332 = vpop.permute.xlu0 %331
    %v381 = vsub.f32 %v44, %v238
    %v382 = vsub.f32 %v45, %v240
    %v383 = vsub.f32 %v46, %v242
    %v384 = vsub.f32 %v47, %v244
    %v385 = vsub.f32 %v48, %v246
    %v386 = vsub.f32 %v49, %v248
    %v387 = vsub.f32 %v50, %v250
    %v388 = vsub.f32 %v51, %v252
    %v389 = vsub.f32 %v52, %v254
    %v390 = vsub.f32 %v53, %v256
    %v391 = vsub.f32 %v54, %v258
    %v392 = vsub.f32 %v55, %v260
    %v393 = vsub.f32 %v56, %v262
    %v394 = vsub.f32 %v57, %v264
    %v395 = vsub.f32 %v58, %v266
    %v396 = vsub.f32 %v59, %v268
    %v397 = vsub.f32 %v60, %v270
    %v398 = vsub.f32 %v61, %v272
    %v399 = vsub.f32 %v62, %v274
    %v400 = vsub.f32 %v63, %v276
    %v401 = vsub.f32 %v64, %v278
    %v402 = vsub.f32 %v65, %v280
    %v403 = vsub.f32 %v66, %v282
    %v404 = vsub.f32 %v67, %v284
    %v405 = vsub.f32 %v68, %v286
    %v406 = vsub.f32 %v69, %v288
    %v407 = vsub.f32 %v70, %v290
    %v408 = vsub.f32 %v71, %v292
    %v409 = vsub.f32 %v72, %v294
    %v410 = vsub.f32 %v73, %v296
    %v411 = vsub.f32 %v74, %v298
    %v412 = vsub.f32 %v75, %v300
    %v413 = vsub.f32 %v76, %v302
    %v414 = vsub.f32 %v77, %v304
    %v415 = vsub.f32 %v78, %v306
    %v416 = vsub.f32 %v79, %v308
    %v417 = vsub.f32 %v80, %v310
    %v418 = vsub.f32 %v81, %v312
    %v419 = vsub.f32 %v82, %v314
    %v420 = vsub.f32 %v83, %v316
    %v421 = vsub.f32 %v84, %v318
    %v422 = vsub.f32 %v85, %v320
    %v423 = vsub.f32 %v86, %v322
    %v424 = vsub.f32 %v87, %v324
    %v425 = vsub.f32 %v88, %v326
    %v426 = vsub.f32 %v89, %v328
    %v427 = vsub.f32 %v90, %v330
    %v428 = vsub.f32 %v91, %v332
    %v429 = vand.u32 2147483647, %v381
    %v430 = vand.u32 2147483647, %v382
    %v431 = vand.u32 2147483647, %v383
    %v432 = vand.u32 2147483647, %v384
    %v433 = vand.u32 2147483647, %v385
    %v434 = vand.u32 2147483647, %v386
    %v435 = vand.u32 2147483647, %v387
    %v436 = vand.u32 2147483647, %v388
    %v437 = vand.u32 2147483647, %v389
    %v438 = vand.u32 2147483647, %v390
    %v439 = vand.u32 2147483647, %v391
    %v440 = vand.u32 2147483647, %v392
    %v441 = vand.u32 2147483647, %v393
    %v442 = vand.u32 2147483647, %v394
    %v443 = vand.u32 2147483647, %v395
    %v444 = vand.u32 2147483647, %v396
    %v445 = vand.u32 2147483647, %v397
    %v446 = vand.u32 2147483647, %v398
    %v447 = vand.u32 2147483647, %v399
    %v448 = vand.u32 2147483647, %v400
    %v449 = vand.u32 2147483647, %v401
    %v450 = vand.u32 2147483647, %v402
    %v451 = vand.u32 2147483647, %v403
    %v452 = vand.u32 2147483647, %v404
    %v453 = vand.u32 2147483647, %v405
    %v454 = vand.u32 2147483647, %v406
    %v455 = vand.u32 2147483647, %v407
    %v456 = vand.u32 2147483647, %v408
    %v457 = vand.u32 2147483647, %v409
    %v458 = vand.u32 2147483647, %v410
    %v459 = vand.u32 2147483647, %v411
    %v460 = vand.u32 2147483647, %v412
    %v461 = vand.u32 2147483647, %v413
    %v462 = vand.u32 2147483647, %v414
    %v463 = vand.u32 2147483647, %v415
    %v464 = vand.u32 2147483647, %v416
    %v465 = vand.u32 2147483647, %v417
    %v466 = vand.u32 2147483647, %v418
    %v467 = vand.u32 2147483647, %v419
    %v468 = vand.u32 2147483647, %v420
    %v469 = vand.u32 2147483647, %v421
    %v470 = vand.u32 2147483647, %v422
    %v471 = vand.u32 2147483647, %v423
    %v472 = vand.u32 2147483647, %v424
    %v473 = vand.u32 2147483647, %v425
    %v474 = vand.u32 2147483647, %v426
    %v475 = vand.u32 2147483647, %v427
    %v476 = vand.u32 2147483647, %v428
    %525 = vrot.lane.b32.xlu0 %v92, 1
    %v526 = vpop.permute.xlu0 %525
    %527 = vrot.lane.b32.xlu0 %v93, 1
    %v528 = vpop.permute.xlu0 %527
    %529 = vrot.lane.b32.xlu0 %v94, 1
    %v530 = vpop.permute.xlu0 %529
    %531 = vrot.lane.b32.xlu0 %v95, 1
    %v532 = vpop.permute.xlu0 %531
    %533 = vrot.lane.b32.xlu0 %v96, 1
    %v534 = vpop.permute.xlu0 %533
    %535 = vrot.lane.b32.xlu0 %v97, 1
    %v536 = vpop.permute.xlu0 %535
    %537 = vrot.lane.b32.xlu0 %v98, 1
    %v538 = vpop.permute.xlu0 %537
    %539 = vrot.lane.b32.xlu0 %v99, 1
    %v540 = vpop.permute.xlu0 %539
    %541 = vrot.lane.b32.xlu0 %v100, 1
    %v542 = vpop.permute.xlu0 %541
    %543 = vrot.lane.b32.xlu0 %v101, 1
    %v544 = vpop.permute.xlu0 %543
    %545 = vrot.lane.b32.xlu0 %v102, 1
    %v546 = vpop.permute.xlu0 %545
    %547 = vrot.lane.b32.xlu0 %v103, 1
    %v548 = vpop.permute.xlu0 %547
    %549 = vrot.lane.b32.xlu0 %v104, 1
    %v550 = vpop.permute.xlu0 %549
    %551 = vrot.lane.b32.xlu0 %v105, 1
    %v552 = vpop.permute.xlu0 %551
    %553 = vrot.lane.b32.xlu0 %v106, 1
    %v554 = vpop.permute.xlu0 %553
    %555 = vrot.lane.b32.xlu0 %v107, 1
    %v556 = vpop.permute.xlu0 %555
    %557 = vrot.lane.b32.xlu0 %v108, 1
    %v558 = vpop.permute.xlu0 %557
    %559 = vrot.lane.b32.xlu0 %v109, 1
    %v560 = vpop.permute.xlu0 %559
    %561 = vrot.lane.b32.xlu0 %v110, 1
    %v562 = vpop.permute.xlu0 %561
    %563 = vrot.lane.b32.xlu0 %v111, 1
    %v564 = vpop.permute.xlu0 %563
    %565 = vrot.lane.b32.xlu0 %v112, 1
    %v566 = vpop.permute.xlu0 %565
    %567 = vrot.lane.b32.xlu0 %v113, 1
    %v568 = vpop.permute.xlu0 %567
    %569 = vrot.lane.b32.xlu0 %v114, 1
    %v570 = vpop.permute.xlu0 %569
    %571 = vrot.lane.b32.xlu0 %v115, 1
    %v572 = vpop.permute.xlu0 %571
    %573 = vrot.lane.b32.xlu0 %v116, 1
    %v574 = vpop.permute.xlu0 %573
    %575 = vrot.lane.b32.xlu0 %v117, 1
    %v576 = vpop.permute.xlu0 %575
    %577 = vrot.lane.b32.xlu0 %v118, 1
    %v578 = vpop.permute.xlu0 %577
    %579 = vrot.lane.b32.xlu0 %v119, 1
    %v580 = vpop.permute.xlu0 %579
    %581 = vrot.lane.b32.xlu0 %v120, 1
    %v582 = vpop.permute.xlu0 %581
    %583 = vrot.lane.b32.xlu0 %v121, 1
    %v584 = vpop.permute.xlu0 %583
    %585 = vrot.lane.b32.xlu0 %v122, 1
    %v586 = vpop.permute.xlu0 %585
    %587 = vrot.lane.b32.xlu0 %v123, 1
    %v588 = vpop.permute.xlu0 %587
    %589 = vrot.lane.b32.xlu0 %v124, 1
    %v590 = vpop.permute.xlu0 %589
    %591 = vrot.lane.b32.xlu0 %v125, 1
    %v592 = vpop.permute.xlu0 %591
    %593 = vrot.lane.b32.xlu0 %v126, 1
    %v594 = vpop.permute.xlu0 %593
    %595 = vrot.lane.b32.xlu0 %v127, 1
    %v596 = vpop.permute.xlu0 %595
    %597 = vrot.lane.b32.xlu0 %v128, 1
    %v598 = vpop.permute.xlu0 %597
    %599 = vrot.lane.b32.xlu0 %v129, 1
    %v600 = vpop.permute.xlu0 %599
    %601 = vrot.lane.b32.xlu0 %v130, 1
    %v602 = vpop.permute.xlu0 %601
    %603 = vrot.lane.b32.xlu0 %v131, 1
    %v604 = vpop.permute.xlu0 %603
    %605 = vrot.lane.b32.xlu0 %v132, 1
    %v606 = vpop.permute.xlu0 %605
    %607 = vrot.lane.b32.xlu0 %v133, 1
    %v608 = vpop.permute.xlu0 %607
    %609 = vrot.lane.b32.xlu0 %v134, 1
    %v610 = vpop.permute.xlu0 %609
    %611 = vrot.lane.b32.xlu0 %v135, 1
    %v612 = vpop.permute.xlu0 %611
    %613 = vrot.lane.b32.xlu0 %v136, 1
    %v614 = vpop.permute.xlu0 %613
    %615 = vrot.lane.b32.xlu0 %v137, 1
    %v616 = vpop.permute.xlu0 %615
    %617 = vrot.lane.b32.xlu0 %v138, 1
    %v618 = vpop.permute.xlu0 %617
    %619 = vrot.lane.b32.xlu0 %v139, 1
    %v620 = vpop.permute.xlu0 %619
    %v669 = vsub.f32 %v92, %v526
    %v670 = vsub.f32 %v93, %v528
    %v671 = vsub.f32 %v94, %v530
    %v672 = vsub.f32 %v95, %v532
    %v673 = vsub.f32 %v96, %v534
    %v674 = vsub.f32 %v97, %v536
    %v675 = vsub.f32 %v98, %v538
    %v676 = vsub.f32 %v99, %v540
    %v677 = vsub.f32 %v100, %v542
    %v678 = vsub.f32 %v101, %v544
    %v679 = vsub.f32 %v102, %v546
    %v680 = vsub.f32 %v103, %v548
    %v681 = vsub.f32 %v104, %v550
    %v682 = vsub.f32 %v105, %v552
    %v683 = vsub.f32 %v106, %v554
    %v684 = vsub.f32 %v107, %v556
    %v685 = vsub.f32 %v108, %v558
    %v686 = vsub.f32 %v109, %v560
    %v687 = vsub.f32 %v110, %v562
    %v688 = vsub.f32 %v111, %v564
    %v689 = vsub.f32 %v112, %v566
    %v690 = vsub.f32 %v113, %v568
    %v691 = vsub.f32 %v114, %v570
    %v692 = vsub.f32 %v115, %v572
    %v693 = vsub.f32 %v116, %v574
    %v694 = vsub.f32 %v117, %v576
    %v695 = vsub.f32 %v118, %v578
    %v696 = vsub.f32 %v119, %v580
    %v697 = vsub.f32 %v120, %v582
    %v698 = vsub.f32 %v121, %v584
    %v699 = vsub.f32 %v122, %v586
    %v700 = vsub.f32 %v123, %v588
    %v701 = vsub.f32 %v124, %v590
    %v702 = vsub.f32 %v125, %v592
    %v703 = vsub.f32 %v126, %v594
    %v704 = vsub.f32 %v127, %v596
    %v705 = vsub.f32 %v128, %v598
    %v706 = vsub.f32 %v129, %v600
    %v707 = vsub.f32 %v130, %v602
    %v708 = vsub.f32 %v131, %v604
    %v709 = vsub.f32 %v132, %v606
    %v710 = vsub.f32 %v133, %v608
    %v711 = vsub.f32 %v134, %v610
    %v712 = vsub.f32 %v135, %v612
    %v713 = vsub.f32 %v136, %v614
    %v714 = vsub.f32 %v137, %v616
    %v715 = vsub.f32 %v138, %v618
    %v716 = vsub.f32 %v139, %v620
    %v717 = vand.u32 2147483647, %v669
    %v718 = vand.u32 2147483647, %v670
    %v719 = vand.u32 2147483647, %v671
    %v720 = vand.u32 2147483647, %v672
    %v721 = vand.u32 2147483647, %v673
    %v722 = vand.u32 2147483647, %v674
    %v723 = vand.u32 2147483647, %v675
    %v724 = vand.u32 2147483647, %v676
    %v725 = vand.u32 2147483647, %v677
    %v726 = vand.u32 2147483647, %v678
    %v727 = vand.u32 2147483647, %v679
    %v728 = vand.u32 2147483647, %v680
    %v729 = vand.u32 2147483647, %v681
    %v730 = vand.u32 2147483647, %v682
    %v731 = vand.u32 2147483647, %v683
    %v732 = vand.u32 2147483647, %v684
    %v733 = vand.u32 2147483647, %v685
    %v734 = vand.u32 2147483647, %v686
    %v735 = vand.u32 2147483647, %v687
    %v736 = vand.u32 2147483647, %v688
    %v737 = vand.u32 2147483647, %v689
    %v738 = vand.u32 2147483647, %v690
    %v739 = vand.u32 2147483647, %v691
    %v740 = vand.u32 2147483647, %v692
    %v741 = vand.u32 2147483647, %v693
    %v742 = vand.u32 2147483647, %v694
    %v743 = vand.u32 2147483647, %v695
    %v744 = vand.u32 2147483647, %v696
    %v745 = vand.u32 2147483647, %v697
    %v746 = vand.u32 2147483647, %v698
    %v747 = vand.u32 2147483647, %v699
    %v748 = vand.u32 2147483647, %v700
    %v749 = vand.u32 2147483647, %v701
    %v750 = vand.u32 2147483647, %v702
    %v751 = vand.u32 2147483647, %v703
    %v752 = vand.u32 2147483647, %v704
    %v753 = vand.u32 2147483647, %v705
    %v754 = vand.u32 2147483647, %v706
    %v755 = vand.u32 2147483647, %v707
    %v756 = vand.u32 2147483647, %v708
    %v757 = vand.u32 2147483647, %v709
    %v758 = vand.u32 2147483647, %v710
    %v759 = vand.u32 2147483647, %v711
    %v760 = vand.u32 2147483647, %v712
    %v761 = vand.u32 2147483647, %v713
    %v762 = vand.u32 2147483647, %v714
    %v763 = vand.u32 2147483647, %v715
    %v764 = vand.u32 2147483647, %v716
    %v765 = vsub.f32 %v717, %v429
    %v766 = vsub.f32 %v718, %v430
    %v767 = vsub.f32 %v719, %v431
    %v768 = vsub.f32 %v720, %v432
    %v769 = vsub.f32 %v721, %v433
    %v770 = vsub.f32 %v722, %v434
    %v771 = vsub.f32 %v723, %v435
    %v772 = vsub.f32 %v724, %v436
    %v773 = vsub.f32 %v725, %v437
    %v774 = vsub.f32 %v726, %v438
    %v775 = vsub.f32 %v727, %v439
    %v776 = vsub.f32 %v728, %v440
    %v777 = vsub.f32 %v729, %v441
    %v778 = vsub.f32 %v730, %v442
    %v779 = vsub.f32 %v731, %v443
    %v780 = vsub.f32 %v732, %v444
    %v781 = vsub.f32 %v733, %v445
    %v782 = vsub.f32 %v734, %v446
    %v783 = vsub.f32 %v735, %v447
    %v784 = vsub.f32 %v736, %v448
    %v785 = vsub.f32 %v737, %v449
    %v786 = vsub.f32 %v738, %v450
    %v787 = vsub.f32 %v739, %v451
    %v788 = vsub.f32 %v740, %v452
    %v789 = vsub.f32 %v741, %v453
    %v790 = vsub.f32 %v742, %v454
    %v791 = vsub.f32 %v743, %v455
    %v792 = vsub.f32 %v744, %v456
    %v793 = vsub.f32 %v745, %v457
    %v794 = vsub.f32 %v746, %v458
    %v795 = vsub.f32 %v747, %v459
    %v796 = vsub.f32 %v748, %v460
    %v797 = vsub.f32 %v749, %v461
    %v798 = vsub.f32 %v750, %v462
    %v799 = vsub.f32 %v751, %v463
    %v800 = vsub.f32 %v752, %v464
    %v801 = vsub.f32 %v753, %v465
    %v802 = vsub.f32 %v754, %v466
    %v803 = vsub.f32 %v755, %v467
    %v804 = vsub.f32 %v756, %v468
    %v805 = vsub.f32 %v757, %v469
    %v806 = vsub.f32 %v758, %v470
    %v807 = vsub.f32 %v759, %v471
    %v808 = vsub.f32 %v760, %v472
    %v809 = vsub.f32 %v761, %v473
    %v810 = vsub.f32 %v762, %v474
    %v811 = vsub.f32 %v763, %v475
    %v812 = vsub.f32 %v764, %v476
    %v813 = vand.u32 2147483647, %v765
    %v814 = vand.u32 2147483647, %v766
    %v815 = vand.u32 2147483647, %v767
    %v816 = vand.u32 2147483647, %v768
    %v817 = vand.u32 2147483647, %v769
    %v818 = vand.u32 2147483647, %v770
    %v819 = vand.u32 2147483647, %v771
    %v820 = vand.u32 2147483647, %v772
    %v821 = vand.u32 2147483647, %v773
    %v822 = vand.u32 2147483647, %v774
    %v823 = vand.u32 2147483647, %v775
    %v824 = vand.u32 2147483647, %v776
    %v825 = vand.u32 2147483647, %v777
    %v826 = vand.u32 2147483647, %v778
    %v827 = vand.u32 2147483647, %v779
    %v828 = vand.u32 2147483647, %v780
    %v829 = vand.u32 2147483647, %v781
    %v830 = vand.u32 2147483647, %v782
    %v831 = vand.u32 2147483647, %v783
    %v832 = vand.u32 2147483647, %v784
    %v833 = vand.u32 2147483647, %v785
    %v834 = vand.u32 2147483647, %v786
    %v835 = vand.u32 2147483647, %v787
    %v836 = vand.u32 2147483647, %v788
    %v837 = vand.u32 2147483647, %v789
    %v838 = vand.u32 2147483647, %v790
    %v839 = vand.u32 2147483647, %v791
    %v840 = vand.u32 2147483647, %v792
    %v841 = vand.u32 2147483647, %v793
    %v842 = vand.u32 2147483647, %v794
    %v843 = vand.u32 2147483647, %v795
    %v844 = vand.u32 2147483647, %v796
    %v845 = vand.u32 2147483647, %v797
    %v846 = vand.u32 2147483647, %v798
    %v847 = vand.u32 2147483647, %v799
    %v848 = vand.u32 2147483647, %v800
    %v849 = vand.u32 2147483647, %v801
    %v850 = vand.u32 2147483647, %v802
    %v851 = vand.u32 2147483647, %v803
    %v852 = vand.u32 2147483647, %v804
    %v853 = vand.u32 2147483647, %v805
    %v854 = vand.u32 2147483647, %v806
    %v855 = vand.u32 2147483647, %v807
    %v856 = vand.u32 2147483647, %v808
    %v857 = vand.u32 2147483647, %v809
    %v858 = vand.u32 2147483647, %v810
    %v859 = vand.u32 2147483647, %v811
    %v860 = vand.u32 2147483647, %v812
    %v861 = vsel %vm165, 1, 0
    %v862 = vsel %vm166, 1, 0
    %v863 = vsel %vm167, 1, 0
    %v864 = vsel %vm168, 1, 0
    %v865 = vsel %vm169, 1, 0
    %v866 = vsel %vm170, 1, 0
    %v867 = vsel %vm171, 1, 0
    %v868 = vsel %vm172, 1, 0
    %v869 = vsel %vm173, 1, 0
    %v870 = vsel %vm174, 1, 0
    %v871 = vsel %vm175, 1, 0
    %v872 = vsel %vm176, 1, 0
    %v873 = vsel %vm177, 1, 0
    %v874 = vsel %vm178, 1, 0
    %v875 = vsel %vm179, 1, 0
    %v876 = vsel %vm180, 1, 0
    %v877 = vsel %vm181, 1, 0
    %v878 = vsel %vm182, 1, 0
    %v879 = vsel %vm183, 1, 0
    %v880 = vsel %vm184, 1, 0
    %v881 = vsel %vm185, 1, 0
    %v882 = vsel %vm186, 1, 0
    %v883 = vsel %vm187, 1, 0
    %v884 = vsel %vm188, 1, 0
    %vm885 = vcmp.eq.s32.totalorder %v861, 1
    %vm886 = vcmp.eq.s32.totalorder %v862, 1
    %vm887 = vcmp.eq.s32.totalorder %v863, 1
    %vm888 = vcmp.eq.s32.totalorder %v864, 1
    %vm889 = vcmp.eq.s32.totalorder %v865, 1
    %vm890 = vcmp.eq.s32.totalorder %v866, 1
    %vm891 = vcmp.eq.s32.totalorder %v867, 1
    %vm892 = vcmp.eq.s32.totalorder %v868, 1
    %vm893 = vcmp.eq.s32.totalorder %v869, 1
    %vm894 = vcmp.eq.s32.totalorder %v870, 1
    %vm895 = vcmp.eq.s32.totalorder %v871, 1
    %vm896 = vcmp.eq.s32.totalorder %v872, 1
    %vm897 = vcmp.eq.s32.totalorder %v873, 1
    %vm898 = vcmp.eq.s32.totalorder %v874, 1
    %vm899 = vcmp.eq.s32.totalorder %v875, 1
    %vm900 = vcmp.eq.s32.totalorder %v876, 1
    %vm901 = vcmp.eq.s32.totalorder %v877, 1
    %vm902 = vcmp.eq.s32.totalorder %v878, 1
    %vm903 = vcmp.eq.s32.totalorder %v879, 1
    %vm904 = vcmp.eq.s32.totalorder %v880, 1
    %vm905 = vcmp.eq.s32.totalorder %v881, 1
    %vm906 = vcmp.eq.s32.totalorder %v882, 1
    %vm907 = vcmp.eq.s32.totalorder %v883, 1
    %vm908 = vcmp.eq.s32.totalorder %v884, 1
    %v909 = vsel %vm885, %v813, 0.0
    %v910 = vsel %vm885, %v814, 0.0
    %v911 = vsel %vm886, %v815, 0.0
    %v912 = vsel %vm886, %v816, 0.0
    %v913 = vsel %vm887, %v817, 0.0
    %v914 = vsel %vm887, %v818, 0.0
    %v915 = vsel %vm888, %v819, 0.0
    %v916 = vsel %vm888, %v820, 0.0
    %v917 = vsel %vm889, %v821, 0.0
    %v918 = vsel %vm889, %v822, 0.0
    %v919 = vsel %vm890, %v823, 0.0
    %v920 = vsel %vm890, %v824, 0.0
    %v921 = vsel %vm891, %v825, 0.0
    %v922 = vsel %vm891, %v826, 0.0
    %v923 = vsel %vm892, %v827, 0.0
    %v924 = vsel %vm892, %v828, 0.0
    %v925 = vsel %vm893, %v829, 0.0
    %v926 = vsel %vm893, %v830, 0.0
    %v927 = vsel %vm894, %v831, 0.0
    %v928 = vsel %vm894, %v832, 0.0
    %v929 = vsel %vm895, %v833, 0.0
    %v930 = vsel %vm895, %v834, 0.0
    %v931 = vsel %vm896, %v835, 0.0
    %v932 = vsel %vm896, %v836, 0.0
    %v933 = vsel %vm897, %v837, 0.0
    %v934 = vsel %vm897, %v838, 0.0
    %v935 = vsel %vm898, %v839, 0.0
    %v936 = vsel %vm898, %v840, 0.0
    %v937 = vsel %vm899, %v841, 0.0
    %v938 = vsel %vm899, %v842, 0.0
    %v939 = vsel %vm900, %v843, 0.0
    %v940 = vsel %vm900, %v844, 0.0
    %v941 = vsel %vm901, %v845, 0.0
    %v942 = vsel %vm901, %v846, 0.0
    %v943 = vsel %vm902, %v847, 0.0
    %v944 = vsel %vm902, %v848, 0.0
    %v945 = vsel %vm903, %v849, 0.0
    %v946 = vsel %vm903, %v850, 0.0
    %v947 = vsel %vm904, %v851, 0.0
    %v948 = vsel %vm904, %v852, 0.0
    %v949 = vsel %vm905, %v853, 0.0
    %v950 = vsel %vm905, %v854, 0.0
    %v951 = vsel %vm906, %v855, 0.0
    %v952 = vsel %vm906, %v856, 0.0
    %v953 = vsel %vm907, %v857, 0.0
    %v954 = vsel %vm907, %v858, 0.0
    %v955 = vsel %vm908, %v859, 0.0
    %v956 = vsel %vm908, %v860, 0.0
    %1005 = vrot.lane.b32.xlu0 %v909, 127
    %v1006 = vpop.permute.xlu0 %1005
    %1007 = vrot.lane.b32.xlu0 %v910, 127
    %v1008 = vpop.permute.xlu0 %1007
    %1009 = vrot.lane.b32.xlu0 %v911, 127
    %v1010 = vpop.permute.xlu0 %1009
    %1011 = vrot.lane.b32.xlu0 %v912, 127
    %v1012 = vpop.permute.xlu0 %1011
    %1013 = vrot.lane.b32.xlu0 %v913, 127
    %v1014 = vpop.permute.xlu0 %1013
    %1015 = vrot.lane.b32.xlu0 %v914, 127
    %v1016 = vpop.permute.xlu0 %1015
    %1017 = vrot.lane.b32.xlu0 %v915, 127
    %v1018 = vpop.permute.xlu0 %1017
    %1019 = vrot.lane.b32.xlu0 %v916, 127
    %v1020 = vpop.permute.xlu0 %1019
    %1021 = vrot.lane.b32.xlu0 %v917, 127
    %v1022 = vpop.permute.xlu0 %1021
    %1023 = vrot.lane.b32.xlu0 %v918, 127
    %v1024 = vpop.permute.xlu0 %1023
    %1025 = vrot.lane.b32.xlu0 %v919, 127
    %v1026 = vpop.permute.xlu0 %1025
    %1027 = vrot.lane.b32.xlu0 %v920, 127
    %v1028 = vpop.permute.xlu0 %1027
    %1029 = vrot.lane.b32.xlu0 %v921, 127
    %v1030 = vpop.permute.xlu0 %1029
    %1031 = vrot.lane.b32.xlu0 %v922, 127
    %v1032 = vpop.permute.xlu0 %1031
    %1033 = vrot.lane.b32.xlu0 %v923, 127
    %v1034 = vpop.permute.xlu0 %1033
    %1035 = vrot.lane.b32.xlu0 %v924, 127
    %v1036 = vpop.permute.xlu0 %1035
    %1037 = vrot.lane.b32.xlu0 %v925, 127
    %v1038 = vpop.permute.xlu0 %1037
    %1039 = vrot.lane.b32.xlu0 %v926, 127
    %v1040 = vpop.permute.xlu0 %1039
    %1041 = vrot.lane.b32.xlu0 %v927, 127
    %v1042 = vpop.permute.xlu0 %1041
    %1043 = vrot.lane.b32.xlu0 %v928, 127
    %v1044 = vpop.permute.xlu0 %1043
    %1045 = vrot.lane.b32.xlu0 %v929, 127
    %v1046 = vpop.permute.xlu0 %1045
    %1047 = vrot.lane.b32.xlu0 %v930, 127
    %v1048 = vpop.permute.xlu0 %1047
    %1049 = vrot.lane.b32.xlu0 %v931, 127
    %v1050 = vpop.permute.xlu0 %1049
    %1051 = vrot.lane.b32.xlu0 %v932, 127
    %v1052 = vpop.permute.xlu0 %1051
    %1053 = vrot.lane.b32.xlu0 %v933, 127
    %v1054 = vpop.permute.xlu0 %1053
    %1055 = vrot.lane.b32.xlu0 %v934, 127
    %v1056 = vpop.permute.xlu0 %1055
    %1057 = vrot.lane.b32.xlu0 %v935, 127
    %v1058 = vpop.permute.xlu0 %1057
    %1059 = vrot.lane.b32.xlu0 %v936, 127
    %v1060 = vpop.permute.xlu0 %1059
    %1061 = vrot.lane.b32.xlu0 %v937, 127
    %v1062 = vpop.permute.xlu0 %1061
    %1063 = vrot.lane.b32.xlu0 %v938, 127
    %v1064 = vpop.permute.xlu0 %1063
    %1065 = vrot.lane.b32.xlu0 %v939, 127
    %v1066 = vpop.permute.xlu0 %1065
    %1067 = vrot.lane.b32.xlu0 %v940, 127
    %v1068 = vpop.permute.xlu0 %1067
    %1069 = vrot.lane.b32.xlu0 %v941, 127
    %v1070 = vpop.permute.xlu0 %1069
    %1071 = vrot.lane.b32.xlu0 %v942, 127
    %v1072 = vpop.permute.xlu0 %1071
    %1073 = vrot.lane.b32.xlu0 %v943, 127
    %v1074 = vpop.permute.xlu0 %1073
    %1075 = vrot.lane.b32.xlu0 %v944, 127
    %v1076 = vpop.permute.xlu0 %1075
    %1077 = vrot.lane.b32.xlu0 %v945, 127
    %v1078 = vpop.permute.xlu0 %1077
    %1079 = vrot.lane.b32.xlu0 %v946, 127
    %v1080 = vpop.permute.xlu0 %1079
    %1081 = vrot.lane.b32.xlu0 %v947, 127
    %v1082 = vpop.permute.xlu0 %1081
    %1083 = vrot.lane.b32.xlu0 %v948, 127
    %v1084 = vpop.permute.xlu0 %1083
    %1085 = vrot.lane.b32.xlu0 %v949, 127
    %v1086 = vpop.permute.xlu0 %1085
    %1087 = vrot.lane.b32.xlu0 %v950, 127
    %v1088 = vpop.permute.xlu0 %1087
    %1089 = vrot.lane.b32.xlu0 %v951, 127
    %v1090 = vpop.permute.xlu0 %1089
    %1091 = vrot.lane.b32.xlu0 %v952, 127
    %v1092 = vpop.permute.xlu0 %1091
    %1093 = vrot.lane.b32.xlu0 %v953, 127
    %v1094 = vpop.permute.xlu0 %1093
    %1095 = vrot.lane.b32.xlu0 %v954, 127
    %v1096 = vpop.permute.xlu0 %1095
    %1097 = vrot.lane.b32.xlu0 %v955, 127
    %v1098 = vpop.permute.xlu0 %1097
    %1099 = vrot.lane.b32.xlu0 %v956, 127
    %v1100 = vpop.permute.xlu0 %1099
    %vm1149 = vcmask 121856
    %v1150 = vsel %vm1149, %v1006, 0.0
    %v1151 = vsel %vm1149, %v1008, 0.0
    %v1152 = vadd.f32 %v1150, %v1151
    %v1153 = vsel %vm1149, %v1010, 0.0
    %v1154 = vadd.f32 %v1152, %v1153
    %v1155 = vsel %vm1149, %v1012, 0.0
    %v1156 = vadd.f32 %v1154, %v1155
    %v1157 = vsel %vm1149, %v1014, 0.0
    %v1158 = vadd.f32 %v1156, %v1157
    %v1159 = vsel %vm1149, %v1016, 0.0
    %v1160 = vadd.f32 %v1158, %v1159
    %v1161 = vsel %vm1149, %v1018, 0.0
    %v1162 = vadd.f32 %v1160, %v1161
    %v1163 = vsel %vm1149, %v1020, 0.0
    %v1164 = vadd.f32 %v1162, %v1163
    %v1165 = vsel %vm1149, %v1022, 0.0
    %v1166 = vadd.f32 %v1164, %v1165
    %v1167 = vsel %vm1149, %v1024, 0.0
    %v1168 = vadd.f32 %v1166, %v1167
    %v1169 = vsel %vm1149, %v1026, 0.0
    %v1170 = vadd.f32 %v1168, %v1169
    %v1171 = vsel %vm1149, %v1028, 0.0
    %v1172 = vadd.f32 %v1170, %v1171
    %v1173 = vsel %vm1149, %v1030, 0.0
    %v1174 = vadd.f32 %v1172, %v1173
    %v1175 = vsel %vm1149, %v1032, 0.0
    %v1176 = vadd.f32 %v1174, %v1175
    %v1177 = vsel %vm1149, %v1034, 0.0
    %v1178 = vadd.f32 %v1176, %v1177
    %v1179 = vsel %vm1149, %v1036, 0.0
    %v1180 = vadd.f32 %v1178, %v1179
    %v1181 = vsel %vm1149, %v1038, 0.0
    %v1182 = vadd.f32 %v1180, %v1181
    %v1183 = vsel %vm1149, %v1040, 0.0
    %v1184 = vadd.f32 %v1182, %v1183
    %v1185 = vsel %vm1149, %v1042, 0.0
    %v1186 = vadd.f32 %v1184, %v1185
    %v1187 = vsel %vm1149, %v1044, 0.0
    %v1188 = vadd.f32 %v1186, %v1187
    %v1189 = vsel %vm1149, %v1046, 0.0
    %v1190 = vadd.f32 %v1188, %v1189
    %v1191 = vsel %vm1149, %v1048, 0.0
    %v1192 = vadd.f32 %v1190, %v1191
    %v1193 = vsel %vm1149, %v1050, 0.0
    %v1194 = vadd.f32 %v1192, %v1193
    %v1195 = vsel %vm1149, %v1052, 0.0
    %v1196 = vadd.f32 %v1194, %v1195
    %v1197 = vsel %vm1149, %v1054, 0.0
    %v1198 = vadd.f32 %v1196, %v1197
    %v1199 = vsel %vm1149, %v1056, 0.0
    %v1200 = vadd.f32 %v1198, %v1199
    %v1201 = vsel %vm1149, %v1058, 0.0
    %v1202 = vadd.f32 %v1200, %v1201
    %v1203 = vsel %vm1149, %v1060, 0.0
    %v1204 = vadd.f32 %v1202, %v1203
    %v1205 = vsel %vm1149, %v1062, 0.0
    %v1206 = vadd.f32 %v1204, %v1205
    %v1207 = vsel %vm1149, %v1064, 0.0
    %v1208 = vadd.f32 %v1206, %v1207
    %v1209 = vsel %vm1149, %v1066, 0.0
    %v1210 = vadd.f32 %v1208, %v1209
    %v1211 = vsel %vm1149, %v1068, 0.0
    %v1212 = vadd.f32 %v1210, %v1211
    %v1213 = vsel %vm1149, %v1070, 0.0
    %v1214 = vadd.f32 %v1212, %v1213
    %v1215 = vsel %vm1149, %v1072, 0.0
    %v1216 = vadd.f32 %v1214, %v1215
    %v1217 = vsel %vm1149, %v1074, 0.0
    %v1218 = vadd.f32 %v1216, %v1217
    %v1219 = vsel %vm1149, %v1076, 0.0
    %v1220 = vadd.f32 %v1218, %v1219
    %v1221 = vsel %vm1149, %v1078, 0.0
    %v1222 = vadd.f32 %v1220, %v1221
    %v1223 = vsel %vm1149, %v1080, 0.0
    %v1224 = vadd.f32 %v1222, %v1223
    %v1225 = vsel %vm1149, %v1082, 0.0
    %v1226 = vadd.f32 %v1224, %v1225
    %v1227 = vsel %vm1149, %v1084, 0.0
    %v1228 = vadd.f32 %v1226, %v1227
    %v1229 = vsel %vm1149, %v1086, 0.0
    %v1230 = vadd.f32 %v1228, %v1229
    %v1231 = vsel %vm1149, %v1088, 0.0
    %v1232 = vadd.f32 %v1230, %v1231
    %v1233 = vsel %vm1149, %v1090, 0.0
    %v1234 = vadd.f32 %v1232, %v1233
    %v1235 = vsel %vm1149, %v1092, 0.0
    %v1236 = vadd.f32 %v1234, %v1235
    %v1237 = vsel %vm1149, %v1094, 0.0
    %v1238 = vadd.f32 %v1236, %v1237
    %v1239 = vsel %vm1149, %v1096, 0.0
    %v1240 = vadd.f32 %v1238, %v1239
    %v1241 = vsel %vm1149, %v1098, 0.0
    %v1242 = vadd.f32 %v1240, %v1241
    %v1243 = vsel %vm1149, %v1100, 0.0
    %v1244 = vadd.f32 %v1242, %v1243
    %1245 = vadd.xlane.f32.xlu0 %v1244
    %v1246 = vpop.xlane.xlu0 %1245
    %v1247 = vrot.slane %v1246, 4
    %v1248 = vadd.f32 %v1246, %v1247
    %v1249 = vrot.slane %v1248, 2
    %v1250 = vadd.f32 %v1248, %v1249
    %v1251 = vrot.slane %v1250, 1
    %v1252 = vadd.f32 %v1250, %v1251
    %s1253 = vtos %v1252
    %s1254 = sadd.f32 %s1253, 0.0
    %v1255 = vand.u32 2147483647, %v92
    %v1256 = vand.u32 2147483647, %v93
    %v1257 = vand.u32 2147483647, %v94
    %v1258 = vand.u32 2147483647, %v95
    %v1259 = vand.u32 2147483647, %v96
    %v1260 = vand.u32 2147483647, %v97
    %v1261 = vand.u32 2147483647, %v98
    %v1262 = vand.u32 2147483647, %v99
    %v1263 = vand.u32 2147483647, %v100
    %v1264 = vand.u32 2147483647, %v101
    %v1265 = vand.u32 2147483647, %v102
    %v1266 = vand.u32 2147483647, %v103
    %v1267 = vand.u32 2147483647, %v104
    %v1268 = vand.u32 2147483647, %v105
    %v1269 = vand.u32 2147483647, %v106
    %v1270 = vand.u32 2147483647, %v107
    %v1271 = vand.u32 2147483647, %v108
    %v1272 = vand.u32 2147483647, %v109
    %v1273 = vand.u32 2147483647, %v110
    %v1274 = vand.u32 2147483647, %v111
    %v1275 = vand.u32 2147483647, %v112
    %v1276 = vand.u32 2147483647, %v113
    %v1277 = vand.u32 2147483647, %v114
    %v1278 = vand.u32 2147483647, %v115
    %v1279 = vand.u32 2147483647, %v116
    %v1280 = vand.u32 2147483647, %v117
    %v1281 = vand.u32 2147483647, %v118
    %v1282 = vand.u32 2147483647, %v119
    %v1283 = vand.u32 2147483647, %v120
    %v1284 = vand.u32 2147483647, %v121
    %v1285 = vand.u32 2147483647, %v122
    %v1286 = vand.u32 2147483647, %v123
    %v1287 = vand.u32 2147483647, %v124
    %v1288 = vand.u32 2147483647, %v125
    %v1289 = vand.u32 2147483647, %v126
    %v1290 = vand.u32 2147483647, %v127
    %v1291 = vand.u32 2147483647, %v128
    %v1292 = vand.u32 2147483647, %v129
    %v1293 = vand.u32 2147483647, %v130
    %v1294 = vand.u32 2147483647, %v131
    %v1295 = vand.u32 2147483647, %v132
    %v1296 = vand.u32 2147483647, %v133
    %v1297 = vand.u32 2147483647, %v134
    %v1298 = vand.u32 2147483647, %v135
    %v1299 = vand.u32 2147483647, %v136
    %v1300 = vand.u32 2147483647, %v137
    %v1301 = vand.u32 2147483647, %v138
    %v1302 = vand.u32 2147483647, %v139
    %v1303 = vand.u32 2147483647, %v44
    %v1304 = vand.u32 2147483647, %v45
    %v1305 = vand.u32 2147483647, %v46
    %v1306 = vand.u32 2147483647, %v47
    %v1307 = vand.u32 2147483647, %v48
    %v1308 = vand.u32 2147483647, %v49
    %v1309 = vand.u32 2147483647, %v50
    %v1310 = vand.u32 2147483647, %v51
    %v1311 = vand.u32 2147483647, %v52
    %v1312 = vand.u32 2147483647, %v53
    %v1313 = vand.u32 2147483647, %v54
    %v1314 = vand.u32 2147483647, %v55
    %v1315 = vand.u32 2147483647, %v56
    %v1316 = vand.u32 2147483647, %v57
    %v1317 = vand.u32 2147483647, %v58
    %v1318 = vand.u32 2147483647, %v59
    %v1319 = vand.u32 2147483647, %v60
    %v1320 = vand.u32 2147483647, %v61
    %v1321 = vand.u32 2147483647, %v62
    %v1322 = vand.u32 2147483647, %v63
    %v1323 = vand.u32 2147483647, %v64
    %v1324 = vand.u32 2147483647, %v65
    %v1325 = vand.u32 2147483647, %v66
    %v1326 = vand.u32 2147483647, %v67
    %v1327 = vand.u32 2147483647, %v68
    %v1328 = vand.u32 2147483647, %v69
    %v1329 = vand.u32 2147483647, %v70
    %v1330 = vand.u32 2147483647, %v71
    %v1331 = vand.u32 2147483647, %v72
    %v1332 = vand.u32 2147483647, %v73
    %v1333 = vand.u32 2147483647, %v74
    %v1334 = vand.u32 2147483647, %v75
    %v1335 = vand.u32 2147483647, %v76
    %v1336 = vand.u32 2147483647, %v77
    %v1337 = vand.u32 2147483647, %v78
    %v1338 = vand.u32 2147483647, %v79
    %v1339 = vand.u32 2147483647, %v80
    %v1340 = vand.u32 2147483647, %v81
    %v1341 = vand.u32 2147483647, %v82
    %v1342 = vand.u32 2147483647, %v83
    %v1343 = vand.u32 2147483647, %v84
    %v1344 = vand.u32 2147483647, %v85
    %v1345 = vand.u32 2147483647, %v86
    %v1346 = vand.u32 2147483647, %v87
    %v1347 = vand.u32 2147483647, %v88
    %v1348 = vand.u32 2147483647, %v89
    %v1349 = vand.u32 2147483647, %v90
    %v1350 = vand.u32 2147483647, %v91
    %v1351 = vsub.f32 %v1255, %v1303
    %v1352 = vsub.f32 %v1256, %v1304
    %v1353 = vsub.f32 %v1257, %v1305
    %v1354 = vsub.f32 %v1258, %v1306
    %v1355 = vsub.f32 %v1259, %v1307
    %v1356 = vsub.f32 %v1260, %v1308
    %v1357 = vsub.f32 %v1261, %v1309
    %v1358 = vsub.f32 %v1262, %v1310
    %v1359 = vsub.f32 %v1263, %v1311
    %v1360 = vsub.f32 %v1264, %v1312
    %v1361 = vsub.f32 %v1265, %v1313
    %v1362 = vsub.f32 %v1266, %v1314
    %v1363 = vsub.f32 %v1267, %v1315
    %v1364 = vsub.f32 %v1268, %v1316
    %v1365 = vsub.f32 %v1269, %v1317
    %v1366 = vsub.f32 %v1270, %v1318
    %v1367 = vsub.f32 %v1271, %v1319
    %v1368 = vsub.f32 %v1272, %v1320
    %v1369 = vsub.f32 %v1273, %v1321
    %v1370 = vsub.f32 %v1274, %v1322
    %v1371 = vsub.f32 %v1275, %v1323
    %v1372 = vsub.f32 %v1276, %v1324
    %v1373 = vsub.f32 %v1277, %v1325
    %v1374 = vsub.f32 %v1278, %v1326
    %v1375 = vsub.f32 %v1279, %v1327
    %v1376 = vsub.f32 %v1280, %v1328
    %v1377 = vsub.f32 %v1281, %v1329
    %v1378 = vsub.f32 %v1282, %v1330
    %v1379 = vsub.f32 %v1283, %v1331
    %v1380 = vsub.f32 %v1284, %v1332
    %v1381 = vsub.f32 %v1285, %v1333
    %v1382 = vsub.f32 %v1286, %v1334
    %v1383 = vsub.f32 %v1287, %v1335
    %v1384 = vsub.f32 %v1288, %v1336
    %v1385 = vsub.f32 %v1289, %v1337
    %v1386 = vsub.f32 %v1290, %v1338
    %v1387 = vsub.f32 %v1291, %v1339
    %v1388 = vsub.f32 %v1292, %v1340
    %v1389 = vsub.f32 %v1293, %v1341
    %v1390 = vsub.f32 %v1294, %v1342
    %v1391 = vsub.f32 %v1295, %v1343
    %v1392 = vsub.f32 %v1296, %v1344
    %v1393 = vsub.f32 %v1297, %v1345
    %v1394 = vsub.f32 %v1298, %v1346
    %v1395 = vsub.f32 %v1299, %v1347
    %v1396 = vsub.f32 %v1300, %v1348
    %v1397 = vsub.f32 %v1301, %v1349
    %v1398 = vsub.f32 %v1302, %v1350
    %v1399 = vand.u32 2147483647, %v1351
    %v1400 = vand.u32 2147483647, %v1352
    %v1401 = vand.u32 2147483647, %v1353
    %v1402 = vand.u32 2147483647, %v1354
    %v1403 = vand.u32 2147483647, %v1355
    %v1404 = vand.u32 2147483647, %v1356
    %v1405 = vand.u32 2147483647, %v1357
    %v1406 = vand.u32 2147483647, %v1358
    %v1407 = vand.u32 2147483647, %v1359
    %v1408 = vand.u32 2147483647, %v1360
    %v1409 = vand.u32 2147483647, %v1361
    %v1410 = vand.u32 2147483647, %v1362
    %v1411 = vand.u32 2147483647, %v1363
    %v1412 = vand.u32 2147483647, %v1364
    %v1413 = vand.u32 2147483647, %v1365
    %v1414 = vand.u32 2147483647, %v1366
    %v1415 = vand.u32 2147483647, %v1367
    %v1416 = vand.u32 2147483647, %v1368
    %v1417 = vand.u32 2147483647, %v1369
    %v1418 = vand.u32 2147483647, %v1370
    %v1419 = vand.u32 2147483647, %v1371
    %v1420 = vand.u32 2147483647, %v1372
    %v1421 = vand.u32 2147483647, %v1373
    %v1422 = vand.u32 2147483647, %v1374
    %v1423 = vand.u32 2147483647, %v1375
    %v1424 = vand.u32 2147483647, %v1376
    %v1425 = vand.u32 2147483647, %v1377
    %v1426 = vand.u32 2147483647, %v1378
    %v1427 = vand.u32 2147483647, %v1379
    %v1428 = vand.u32 2147483647, %v1380
    %v1429 = vand.u32 2147483647, %v1381
    %v1430 = vand.u32 2147483647, %v1382
    %v1431 = vand.u32 2147483647, %v1383
    %v1432 = vand.u32 2147483647, %v1384
    %v1433 = vand.u32 2147483647, %v1385
    %v1434 = vand.u32 2147483647, %v1386
    %v1435 = vand.u32 2147483647, %v1387
    %v1436 = vand.u32 2147483647, %v1388
    %v1437 = vand.u32 2147483647, %v1389
    %v1438 = vand.u32 2147483647, %v1390
    %v1439 = vand.u32 2147483647, %v1391
    %v1440 = vand.u32 2147483647, %v1392
    %v1441 = vand.u32 2147483647, %v1393
    %v1442 = vand.u32 2147483647, %v1394
    %v1443 = vand.u32 2147483647, %v1395
    %v1444 = vand.u32 2147483647, %v1396
    %v1445 = vand.u32 2147483647, %v1397
    %v1446 = vand.u32 2147483647, %v1398
    %v1447 = vsel %vm885, %v1399, 0.0
    %v1448 = vsel %vm885, %v1400, 0.0
    %v1449 = vsel %vm886, %v1401, 0.0
    %v1450 = vsel %vm886, %v1402, 0.0
    %v1451 = vsel %vm887, %v1403, 0.0
    %v1452 = vsel %vm887, %v1404, 0.0
    %v1453 = vsel %vm888, %v1405, 0.0
    %v1454 = vsel %vm888, %v1406, 0.0
    %v1455 = vsel %vm889, %v1407, 0.0
    %v1456 = vsel %vm889, %v1408, 0.0
    %v1457 = vsel %vm890, %v1409, 0.0
    %v1458 = vsel %vm890, %v1410, 0.0
    %v1459 = vsel %vm891, %v1411, 0.0
    %v1460 = vsel %vm891, %v1412, 0.0
    %v1461 = vsel %vm892, %v1413, 0.0
    %v1462 = vsel %vm892, %v1414, 0.0
    %v1463 = vsel %vm893, %v1415, 0.0
    %v1464 = vsel %vm893, %v1416, 0.0
    %v1465 = vsel %vm894, %v1417, 0.0
    %v1466 = vsel %vm894, %v1418, 0.0
    %v1467 = vsel %vm895, %v1419, 0.0
    %v1468 = vsel %vm895, %v1420, 0.0
    %v1469 = vsel %vm896, %v1421, 0.0
    %v1470 = vsel %vm896, %v1422, 0.0
    %v1471 = vsel %vm897, %v1423, 0.0
    %v1472 = vsel %vm897, %v1424, 0.0
    %v1473 = vsel %vm898, %v1425, 0.0
    %v1474 = vsel %vm898, %v1426, 0.0
    %v1475 = vsel %vm899, %v1427, 0.0
    %v1476 = vsel %vm899, %v1428, 0.0
    %v1477 = vsel %vm900, %v1429, 0.0
    %v1478 = vsel %vm900, %v1430, 0.0
    %v1479 = vsel %vm901, %v1431, 0.0
    %v1480 = vsel %vm901, %v1432, 0.0
    %v1481 = vsel %vm902, %v1433, 0.0
    %v1482 = vsel %vm902, %v1434, 0.0
    %v1483 = vsel %vm903, %v1435, 0.0
    %v1484 = vsel %vm903, %v1436, 0.0
    %v1485 = vsel %vm904, %v1437, 0.0
    %v1486 = vsel %vm904, %v1438, 0.0
    %v1487 = vsel %vm905, %v1439, 0.0
    %v1488 = vsel %vm905, %v1440, 0.0
    %v1489 = vsel %vm906, %v1441, 0.0
    %v1490 = vsel %vm906, %v1442, 0.0
    %v1491 = vsel %vm907, %v1443, 0.0
    %v1492 = vsel %vm907, %v1444, 0.0
    %v1493 = vsel %vm908, %v1445, 0.0
    %v1494 = vsel %vm908, %v1446, 0.0
    %1543 = vrot.lane.b32.xlu0 %v1447, 113
    %v1544 = vpop.permute.xlu0 %1543
    %1545 = vrot.lane.b32.xlu0 %v1448, 113
    %v1546 = vpop.permute.xlu0 %1545
    %1547 = vrot.lane.b32.xlu0 %v1449, 113
    %v1548 = vpop.permute.xlu0 %1547
    %1549 = vrot.lane.b32.xlu0 %v1450, 113
    %v1550 = vpop.permute.xlu0 %1549
    %1551 = vrot.lane.b32.xlu0 %v1451, 113
    %v1552 = vpop.permute.xlu0 %1551
    %1553 = vrot.lane.b32.xlu0 %v1452, 113
    %v1554 = vpop.permute.xlu0 %1553
    %1555 = vrot.lane.b32.xlu0 %v1453, 113
    %v1556 = vpop.permute.xlu0 %1555
    %1557 = vrot.lane.b32.xlu0 %v1454, 113
    %v1558 = vpop.permute.xlu0 %1557
    %1559 = vrot.lane.b32.xlu0 %v1455, 113
    %v1560 = vpop.permute.xlu0 %1559
    %1561 = vrot.lane.b32.xlu0 %v1456, 113
    %v1562 = vpop.permute.xlu0 %1561
    %1563 = vrot.lane.b32.xlu0 %v1457, 113
    %v1564 = vpop.permute.xlu0 %1563
    %1565 = vrot.lane.b32.xlu0 %v1458, 113
    %v1566 = vpop.permute.xlu0 %1565
    %1567 = vrot.lane.b32.xlu0 %v1459, 113
    %v1568 = vpop.permute.xlu0 %1567
    %1569 = vrot.lane.b32.xlu0 %v1460, 113
    %v1570 = vpop.permute.xlu0 %1569
    %1571 = vrot.lane.b32.xlu0 %v1461, 113
    %v1572 = vpop.permute.xlu0 %1571
    %1573 = vrot.lane.b32.xlu0 %v1462, 113
    %v1574 = vpop.permute.xlu0 %1573
    %1575 = vrot.lane.b32.xlu0 %v1463, 113
    %v1576 = vpop.permute.xlu0 %1575
    %1577 = vrot.lane.b32.xlu0 %v1464, 113
    %v1578 = vpop.permute.xlu0 %1577
    %1579 = vrot.lane.b32.xlu0 %v1465, 113
    %v1580 = vpop.permute.xlu0 %1579
    %1581 = vrot.lane.b32.xlu0 %v1466, 113
    %v1582 = vpop.permute.xlu0 %1581
    %1583 = vrot.lane.b32.xlu0 %v1467, 113
    %v1584 = vpop.permute.xlu0 %1583
    %1585 = vrot.lane.b32.xlu0 %v1468, 113
    %v1586 = vpop.permute.xlu0 %1585
    %1587 = vrot.lane.b32.xlu0 %v1469, 113
    %v1588 = vpop.permute.xlu0 %1587
    %1589 = vrot.lane.b32.xlu0 %v1470, 113
    %v1590 = vpop.permute.xlu0 %1589
    %1591 = vrot.lane.b32.xlu0 %v1471, 113
    %v1592 = vpop.permute.xlu0 %1591
    %1593 = vrot.lane.b32.xlu0 %v1472, 113
    %v1594 = vpop.permute.xlu0 %1593
    %1595 = vrot.lane.b32.xlu0 %v1473, 113
    %v1596 = vpop.permute.xlu0 %1595
    %1597 = vrot.lane.b32.xlu0 %v1474, 113
    %v1598 = vpop.permute.xlu0 %1597
    %1599 = vrot.lane.b32.xlu0 %v1475, 113
    %v1600 = vpop.permute.xlu0 %1599
    %1601 = vrot.lane.b32.xlu0 %v1476, 113
    %v1602 = vpop.permute.xlu0 %1601
    %1603 = vrot.lane.b32.xlu0 %v1477, 113
    %v1604 = vpop.permute.xlu0 %1603
    %1605 = vrot.lane.b32.xlu0 %v1478, 113
    %v1606 = vpop.permute.xlu0 %1605
    %1607 = vrot.lane.b32.xlu0 %v1479, 113
    %v1608 = vpop.permute.xlu0 %1607
    %1609 = vrot.lane.b32.xlu0 %v1480, 113
    %v1610 = vpop.permute.xlu0 %1609
    %1611 = vrot.lane.b32.xlu0 %v1481, 113
    %v1612 = vpop.permute.xlu0 %1611
    %1613 = vrot.lane.b32.xlu0 %v1482, 113
    %v1614 = vpop.permute.xlu0 %1613
    %1615 = vrot.lane.b32.xlu0 %v1483, 113
    %v1616 = vpop.permute.xlu0 %1615
    %1617 = vrot.lane.b32.xlu0 %v1484, 113
    %v1618 = vpop.permute.xlu0 %1617
    %1619 = vrot.lane.b32.xlu0 %v1485, 113
    %v1620 = vpop.permute.xlu0 %1619
    %1621 = vrot.lane.b32.xlu0 %v1486, 113
    %v1622 = vpop.permute.xlu0 %1621
    %1623 = vrot.lane.b32.xlu0 %v1487, 113
    %v1624 = vpop.permute.xlu0 %1623
    %1625 = vrot.lane.b32.xlu0 %v1488, 113
    %v1626 = vpop.permute.xlu0 %1625
    %1627 = vrot.lane.b32.xlu0 %v1489, 113
    %v1628 = vpop.permute.xlu0 %1627
    %1629 = vrot.lane.b32.xlu0 %v1490, 113
    %v1630 = vpop.permute.xlu0 %1629
    %1631 = vrot.lane.b32.xlu0 %v1491, 113
    %v1632 = vpop.permute.xlu0 %1631
    %1633 = vrot.lane.b32.xlu0 %v1492, 113
    %v1634 = vpop.permute.xlu0 %1633
    %1635 = vrot.lane.b32.xlu0 %v1493, 113
    %v1636 = vpop.permute.xlu0 %1635
    %1637 = vrot.lane.b32.xlu0 %v1494, 113
    %v1638 = vpop.permute.xlu0 %1637
    %vm1687 = vcmask 7168
    %v1688 = vsel %vm1687, %v1544, 0.0
    %v1689 = vsel %vm1687, %v1546, 0.0
    %v1690 = vadd.f32 %v1688, %v1689
    %v1691 = vsel %vm1687, %v1548, 0.0
    %v1692 = vadd.f32 %v1690, %v1691
    %v1693 = vsel %vm1687, %v1550, 0.0
    %v1694 = vadd.f32 %v1692, %v1693
    %v1695 = vsel %vm1687, %v1552, 0.0
    %v1696 = vadd.f32 %v1694, %v1695
    %v1697 = vsel %vm1687, %v1554, 0.0
    %v1698 = vadd.f32 %v1696, %v1697
    %v1699 = vsel %vm1687, %v1556, 0.0
    %v1700 = vadd.f32 %v1698, %v1699
    %v1701 = vsel %vm1687, %v1558, 0.0
    %v1702 = vadd.f32 %v1700, %v1701
    %v1703 = vsel %vm1687, %v1560, 0.0
    %v1704 = vadd.f32 %v1702, %v1703
    %v1705 = vsel %vm1687, %v1562, 0.0
    %v1706 = vadd.f32 %v1704, %v1705
    %v1707 = vsel %vm1687, %v1564, 0.0
    %v1708 = vadd.f32 %v1706, %v1707
    %v1709 = vsel %vm1687, %v1566, 0.0
    %v1710 = vadd.f32 %v1708, %v1709
    %v1711 = vsel %vm1687, %v1568, 0.0
    %v1712 = vadd.f32 %v1710, %v1711
    %v1713 = vsel %vm1687, %v1570, 0.0
    %v1714 = vadd.f32 %v1712, %v1713
    %v1715 = vsel %vm1687, %v1572, 0.0
    %v1716 = vadd.f32 %v1714, %v1715
    %v1717 = vsel %vm1687, %v1574, 0.0
    %v1718 = vadd.f32 %v1716, %v1717
    %v1719 = vsel %vm1687, %v1576, 0.0
    %v1720 = vadd.f32 %v1718, %v1719
    %v1721 = vsel %vm1687, %v1578, 0.0
    %v1722 = vadd.f32 %v1720, %v1721
    %v1723 = vsel %vm1687, %v1580, 0.0
    %v1724 = vadd.f32 %v1722, %v1723
    %v1725 = vsel %vm1687, %v1582, 0.0
    %v1726 = vadd.f32 %v1724, %v1725
    %v1727 = vsel %vm1687, %v1584, 0.0
    %v1728 = vadd.f32 %v1726, %v1727
    %v1729 = vsel %vm1687, %v1586, 0.0
    %v1730 = vadd.f32 %v1728, %v1729
    %v1731 = vsel %vm1687, %v1588, 0.0
    %v1732 = vadd.f32 %v1730, %v1731
    %v1733 = vsel %vm1687, %v1590, 0.0
    %v1734 = vadd.f32 %v1732, %v1733
    %v1735 = vsel %vm1687, %v1592, 0.0
    %v1736 = vadd.f32 %v1734, %v1735
    %v1737 = vsel %vm1687, %v1594, 0.0
    %v1738 = vadd.f32 %v1736, %v1737
    %v1739 = vsel %vm1687, %v1596, 0.0
    %v1740 = vadd.f32 %v1738, %v1739
    %v1741 = vsel %vm1687, %v1598, 0.0
    %v1742 = vadd.f32 %v1740, %v1741
    %v1743 = vsel %vm1687, %v1600, 0.0
    %v1744 = vadd.f32 %v1742, %v1743
    %v1745 = vsel %vm1687, %v1602, 0.0
    %v1746 = vadd.f32 %v1744, %v1745
    %v1747 = vsel %vm1687, %v1604, 0.0
    %v1748 = vadd.f32 %v1746, %v1747
    %v1749 = vsel %vm1687, %v1606, 0.0
    %v1750 = vadd.f32 %v1748, %v1749
    %v1751 = vsel %vm1687, %v1608, 0.0
    %v1752 = vadd.f32 %v1750, %v1751
    %v1753 = vsel %vm1687, %v1610, 0.0
    %v1754 = vadd.f32 %v1752, %v1753
    %v1755 = vsel %vm1687, %v1612, 0.0
    %v1756 = vadd.f32 %v1754, %v1755
    %v1757 = vsel %vm1687, %v1614, 0.0
    %v1758 = vadd.f32 %v1756, %v1757
    %v1759 = vsel %vm1687, %v1616, 0.0
    %v1760 = vadd.f32 %v1758, %v1759
    %v1761 = vsel %vm1687, %v1618, 0.0
    %v1762 = vadd.f32 %v1760, %v1761
    %v1763 = vsel %vm1687, %v1620, 0.0
    %v1764 = vadd.f32 %v1762, %v1763
    %v1765 = vsel %vm1687, %v1622, 0.0
    %v1766 = vadd.f32 %v1764, %v1765
    %v1767 = vsel %vm1687, %v1624, 0.0
    %v1768 = vadd.f32 %v1766, %v1767
    %v1769 = vsel %vm1687, %v1626, 0.0
    %v1770 = vadd.f32 %v1768, %v1769
    %v1771 = vsel %vm1687, %v1628, 0.0
    %v1772 = vadd.f32 %v1770, %v1771
    %v1773 = vsel %vm1687, %v1630, 0.0
    %v1774 = vadd.f32 %v1772, %v1773
    %v1775 = vsel %vm1687, %v1632, 0.0
    %v1776 = vadd.f32 %v1774, %v1775
    %v1777 = vsel %vm1687, %v1634, 0.0
    %v1778 = vadd.f32 %v1776, %v1777
    %v1779 = vsel %vm1687, %v1636, 0.0
    %v1780 = vadd.f32 %v1778, %v1779
    %v1781 = vsel %vm1687, %v1638, 0.0
    %v1782 = vadd.f32 %v1780, %v1781
    %1783 = vadd.xlane.f32.xlu0 %v1782
    %v1784 = vpop.xlane.xlu0 %1783
    %v1785 = vrot.slane %v1784, 4
    %v1786 = vadd.f32 %v1784, %v1785
    %v1787 = vrot.slane %v1786, 2
    %v1788 = vadd.f32 %v1786, %v1787
    %v1789 = vrot.slane %v1788, 1
    %v1790 = vadd.f32 %v1788, %v1789
    %s1791 = vtos %v1790
    %s1792 = sadd.f32 %s1254, %s1791
    %vm1793 = vcmask 1040384
    %v1794 = vrot.slane %v44, 7
    %v1795 = vrot.slane %v45, 7
    %v1796 = vsel %vm1793, %v1794, %v1795
    %v1797 = vrot.slane %v46, 7
    %v1798 = vrot.slane %v47, 7
    %v1799 = vsel %vm1793, %v1797, %v1798
    %v1800 = vrot.slane %v48, 7
    %v1801 = vrot.slane %v49, 7
    %v1802 = vsel %vm1793, %v1800, %v1801
    %v1803 = vrot.slane %v50, 7
    %v1804 = vrot.slane %v51, 7
    %v1805 = vsel %vm1793, %v1803, %v1804
    %v1806 = vrot.slane %v52, 7
    %v1807 = vrot.slane %v53, 7
    %v1808 = vsel %vm1793, %v1806, %v1807
    %v1809 = vrot.slane %v54, 7
    %v1810 = vrot.slane %v55, 7
    %v1811 = vsel %vm1793, %v1809, %v1810
    %v1812 = vrot.slane %v56, 7
    %v1813 = vrot.slane %v57, 7
    %v1814 = vsel %vm1793, %v1812, %v1813
    %v1815 = vrot.slane %v58, 7
    %v1816 = vrot.slane %v59, 7
    %v1817 = vsel %vm1793, %v1815, %v1816
    %v1818 = vrot.slane %v60, 7
    %v1819 = vrot.slane %v61, 7
    %v1820 = vsel %vm1793, %v1818, %v1819
    %v1821 = vrot.slane %v62, 7
    %v1822 = vrot.slane %v63, 7
    %v1823 = vsel %vm1793, %v1821, %v1822
    %v1824 = vrot.slane %v64, 7
    %v1825 = vrot.slane %v65, 7
    %v1826 = vsel %vm1793, %v1824, %v1825
    %v1827 = vrot.slane %v66, 7
    %v1828 = vrot.slane %v67, 7
    %v1829 = vsel %vm1793, %v1827, %v1828
    %v1830 = vrot.slane %v68, 7
    %v1831 = vrot.slane %v69, 7
    %v1832 = vsel %vm1793, %v1830, %v1831
    %v1833 = vrot.slane %v70, 7
    %v1834 = vrot.slane %v71, 7
    %v1835 = vsel %vm1793, %v1833, %v1834
    %v1836 = vrot.slane %v72, 7
    %v1837 = vrot.slane %v73, 7
    %v1838 = vsel %vm1793, %v1836, %v1837
    %v1839 = vrot.slane %v74, 7
    %v1840 = vrot.slane %v75, 7
    %v1841 = vsel %vm1793, %v1839, %v1840
    %v1842 = vrot.slane %v76, 7
    %v1843 = vrot.slane %v77, 7
    %v1844 = vsel %vm1793, %v1842, %v1843
    %v1845 = vrot.slane %v78, 7
    %v1846 = vrot.slane %v79, 7
    %v1847 = vsel %vm1793, %v1845, %v1846
    %v1848 = vrot.slane %v80, 7
    %v1849 = vrot.slane %v81, 7
    %v1850 = vsel %vm1793, %v1848, %v1849
    %v1851 = vrot.slane %v82, 7
    %v1852 = vrot.slane %v83, 7
    %v1853 = vsel %vm1793, %v1851, %v1852
    %v1854 = vrot.slane %v84, 7
    %v1855 = vrot.slane %v85, 7
    %v1856 = vsel %vm1793, %v1854, %v1855
    %v1857 = vrot.slane %v86, 7
    %v1858 = vrot.slane %v87, 7
    %v1859 = vsel %vm1793, %v1857, %v1858
    %v1860 = vrot.slane %v88, 7
    %v1861 = vrot.slane %v89, 7
    %v1862 = vsel %vm1793, %v1860, %v1861
    %v1863 = vrot.slane %v90, 7
    %v1864 = vrot.slane %v91, 7
    %v1865 = vsel %vm1793, %v1863, %v1864
    %v1914 = vsub.f32 %v44, %v1794
    %v1915 = vsub.f32 %v45, %v1796
    %v1916 = vsub.f32 %v46, %v1797
    %v1917 = vsub.f32 %v47, %v1799
    %v1918 = vsub.f32 %v48, %v1800
    %v1919 = vsub.f32 %v49, %v1802
    %v1920 = vsub.f32 %v50, %v1803
    %v1921 = vsub.f32 %v51, %v1805
    %v1922 = vsub.f32 %v52, %v1806
    %v1923 = vsub.f32 %v53, %v1808
    %v1924 = vsub.f32 %v54, %v1809
    %v1925 = vsub.f32 %v55, %v1811
    %v1926 = vsub.f32 %v56, %v1812
    %v1927 = vsub.f32 %v57, %v1814
    %v1928 = vsub.f32 %v58, %v1815
    %v1929 = vsub.f32 %v59, %v1817
    %v1930 = vsub.f32 %v60, %v1818
    %v1931 = vsub.f32 %v61, %v1820
    %v1932 = vsub.f32 %v62, %v1821
    %v1933 = vsub.f32 %v63, %v1823
    %v1934 = vsub.f32 %v64, %v1824
    %v1935 = vsub.f32 %v65, %v1826
    %v1936 = vsub.f32 %v66, %v1827
    %v1937 = vsub.f32 %v67, %v1829
    %v1938 = vsub.f32 %v68, %v1830
    %v1939 = vsub.f32 %v69, %v1832
    %v1940 = vsub.f32 %v70, %v1833
    %v1941 = vsub.f32 %v71, %v1835
    %v1942 = vsub.f32 %v72, %v1836
    %v1943 = vsub.f32 %v73, %v1838
    %v1944 = vsub.f32 %v74, %v1839
    %v1945 = vsub.f32 %v75, %v1841
    %v1946 = vsub.f32 %v76, %v1842
    %v1947 = vsub.f32 %v77, %v1844
    %v1948 = vsub.f32 %v78, %v1845
    %v1949 = vsub.f32 %v79, %v1847
    %v1950 = vsub.f32 %v80, %v1848
    %v1951 = vsub.f32 %v81, %v1850
    %v1952 = vsub.f32 %v82, %v1851
    %v1953 = vsub.f32 %v83, %v1853
    %v1954 = vsub.f32 %v84, %v1854
    %v1955 = vsub.f32 %v85, %v1856
    %v1956 = vsub.f32 %v86, %v1857
    %v1957 = vsub.f32 %v87, %v1859
    %v1958 = vsub.f32 %v88, %v1860
    %v1959 = vsub.f32 %v89, %v1862
    %v1960 = vsub.f32 %v90, %v1863
    %v1961 = vsub.f32 %v91, %v1865
    %v1962 = vand.u32 2147483647, %v1914
    %v1963 = vand.u32 2147483647, %v1915
    %v1964 = vand.u32 2147483647, %v1916
    %v1965 = vand.u32 2147483647, %v1917
    %v1966 = vand.u32 2147483647, %v1918
    %v1967 = vand.u32 2147483647, %v1919
    %v1968 = vand.u32 2147483647, %v1920
    %v1969 = vand.u32 2147483647, %v1921
    %v1970 = vand.u32 2147483647, %v1922
    %v1971 = vand.u32 2147483647, %v1923
    %v1972 = vand.u32 2147483647, %v1924
    %v1973 = vand.u32 2147483647, %v1925
    %v1974 = vand.u32 2147483647, %v1926
    %v1975 = vand.u32 2147483647, %v1927
    %v1976 = vand.u32 2147483647, %v1928
    %v1977 = vand.u32 2147483647, %v1929
    %v1978 = vand.u32 2147483647, %v1930
    %v1979 = vand.u32 2147483647, %v1931
    %v1980 = vand.u32 2147483647, %v1932
    %v1981 = vand.u32 2147483647, %v1933
    %v1982 = vand.u32 2147483647, %v1934
    %v1983 = vand.u32 2147483647, %v1935
    %v1984 = vand.u32 2147483647, %v1936
    %v1985 = vand.u32 2147483647, %v1937
    %v1986 = vand.u32 2147483647, %v1938
    %v1987 = vand.u32 2147483647, %v1939
    %v1988 = vand.u32 2147483647, %v1940
    %v1989 = vand.u32 2147483647, %v1941
    %v1990 = vand.u32 2147483647, %v1942
    %v1991 = vand.u32 2147483647, %v1943
    %v1992 = vand.u32 2147483647, %v1944
    %v1993 = vand.u32 2147483647, %v1945
    %v1994 = vand.u32 2147483647, %v1946
    %v1995 = vand.u32 2147483647, %v1947
    %v1996 = vand.u32 2147483647, %v1948
    %v1997 = vand.u32 2147483647, %v1949
    %v1998 = vand.u32 2147483647, %v1950
    %v1999 = vand.u32 2147483647, %v1951
    %v2000 = vand.u32 2147483647, %v1952
    %v2001 = vand.u32 2147483647, %v1953
    %v2002 = vand.u32 2147483647, %v1954
    %v2003 = vand.u32 2147483647, %v1955
    %v2004 = vand.u32 2147483647, %v1956
    %v2005 = vand.u32 2147483647, %v1957
    %v2006 = vand.u32 2147483647, %v1958
    %v2007 = vand.u32 2147483647, %v1959
    %v2008 = vand.u32 2147483647, %v1960
    %v2009 = vand.u32 2147483647, %v1961
    %v2010 = vrot.slane %v92, 7
    %v2011 = vrot.slane %v93, 7
    %v2012 = vsel %vm1793, %v2010, %v2011
    %v2013 = vrot.slane %v94, 7
    %v2014 = vrot.slane %v95, 7
    %v2015 = vsel %vm1793, %v2013, %v2014
    %v2016 = vrot.slane %v96, 7
    %v2017 = vrot.slane %v97, 7
    %v2018 = vsel %vm1793, %v2016, %v2017
    %v2019 = vrot.slane %v98, 7
    %v2020 = vrot.slane %v99, 7
    %v2021 = vsel %vm1793, %v2019, %v2020
    %v2022 = vrot.slane %v100, 7
    %v2023 = vrot.slane %v101, 7
    %v2024 = vsel %vm1793, %v2022, %v2023
    %v2025 = vrot.slane %v102, 7
    %v2026 = vrot.slane %v103, 7
    %v2027 = vsel %vm1793, %v2025, %v2026
    %v2028 = vrot.slane %v104, 7
    %v2029 = vrot.slane %v105, 7
    %v2030 = vsel %vm1793, %v2028, %v2029
    %v2031 = vrot.slane %v106, 7
    %v2032 = vrot.slane %v107, 7
    %v2033 = vsel %vm1793, %v2031, %v2032
    %v2034 = vrot.slane %v108, 7
    %v2035 = vrot.slane %v109, 7
    %v2036 = vsel %vm1793, %v2034, %v2035
    %v2037 = vrot.slane %v110, 7
    %v2038 = vrot.slane %v111, 7
    %v2039 = vsel %vm1793, %v2037, %v2038
    %v2040 = vrot.slane %v112, 7
    %v2041 = vrot.slane %v113, 7
    %v2042 = vsel %vm1793, %v2040, %v2041
    %v2043 = vrot.slane %v114, 7
    %v2044 = vrot.slane %v115, 7
    %v2045 = vsel %vm1793, %v2043, %v2044
    %v2046 = vrot.slane %v116, 7
    %v2047 = vrot.slane %v117, 7
    %v2048 = vsel %vm1793, %v2046, %v2047
    %v2049 = vrot.slane %v118, 7
    %v2050 = vrot.slane %v119, 7
    %v2051 = vsel %vm1793, %v2049, %v2050
    %v2052 = vrot.slane %v120, 7
    %v2053 = vrot.slane %v121, 7
    %v2054 = vsel %vm1793, %v2052, %v2053
    %v2055 = vrot.slane %v122, 7
    %v2056 = vrot.slane %v123, 7
    %v2057 = vsel %vm1793, %v2055, %v2056
    %v2058 = vrot.slane %v124, 7
    %v2059 = vrot.slane %v125, 7
    %v2060 = vsel %vm1793, %v2058, %v2059
    %v2061 = vrot.slane %v126, 7
    %v2062 = vrot.slane %v127, 7
    %v2063 = vsel %vm1793, %v2061, %v2062
    %v2064 = vrot.slane %v128, 7
    %v2065 = vrot.slane %v129, 7
    %v2066 = vsel %vm1793, %v2064, %v2065
    %v2067 = vrot.slane %v130, 7
    %v2068 = vrot.slane %v131, 7
    %v2069 = vsel %vm1793, %v2067, %v2068
    %v2070 = vrot.slane %v132, 7
    %v2071 = vrot.slane %v133, 7
    %v2072 = vsel %vm1793, %v2070, %v2071
    %v2073 = vrot.slane %v134, 7
    %v2074 = vrot.slane %v135, 7
    %v2075 = vsel %vm1793, %v2073, %v2074
    %v2076 = vrot.slane %v136, 7
    %v2077 = vrot.slane %v137, 7
    %v2078 = vsel %vm1793, %v2076, %v2077
    %v2079 = vrot.slane %v138, 7
    %v2080 = vrot.slane %v139, 7
    %v2081 = vsel %vm1793, %v2079, %v2080
    %v2130 = vsub.f32 %v92, %v2010
    %v2131 = vsub.f32 %v93, %v2012
    %v2132 = vsub.f32 %v94, %v2013
    %v2133 = vsub.f32 %v95, %v2015
    %v2134 = vsub.f32 %v96, %v2016
    %v2135 = vsub.f32 %v97, %v2018
    %v2136 = vsub.f32 %v98, %v2019
    %v2137 = vsub.f32 %v99, %v2021
    %v2138 = vsub.f32 %v100, %v2022
    %v2139 = vsub.f32 %v101, %v2024
    %v2140 = vsub.f32 %v102, %v2025
    %v2141 = vsub.f32 %v103, %v2027
    %v2142 = vsub.f32 %v104, %v2028
    %v2143 = vsub.f32 %v105, %v2030
    %v2144 = vsub.f32 %v106, %v2031
    %v2145 = vsub.f32 %v107, %v2033
    %v2146 = vsub.f32 %v108, %v2034
    %v2147 = vsub.f32 %v109, %v2036
    %v2148 = vsub.f32 %v110, %v2037
    %v2149 = vsub.f32 %v111, %v2039
    %v2150 = vsub.f32 %v112, %v2040
    %v2151 = vsub.f32 %v113, %v2042
    %v2152 = vsub.f32 %v114, %v2043
    %v2153 = vsub.f32 %v115, %v2045
    %v2154 = vsub.f32 %v116, %v2046
    %v2155 = vsub.f32 %v117, %v2048
    %v2156 = vsub.f32 %v118, %v2049
    %v2157 = vsub.f32 %v119, %v2051
    %v2158 = vsub.f32 %v120, %v2052
    %v2159 = vsub.f32 %v121, %v2054
    %v2160 = vsub.f32 %v122, %v2055
    %v2161 = vsub.f32 %v123, %v2057
    %v2162 = vsub.f32 %v124, %v2058
    %v2163 = vsub.f32 %v125, %v2060
    %v2164 = vsub.f32 %v126, %v2061
    %v2165 = vsub.f32 %v127, %v2063
    %v2166 = vsub.f32 %v128, %v2064
    %v2167 = vsub.f32 %v129, %v2066
    %v2168 = vsub.f32 %v130, %v2067
    %v2169 = vsub.f32 %v131, %v2069
    %v2170 = vsub.f32 %v132, %v2070
    %v2171 = vsub.f32 %v133, %v2072
    %v2172 = vsub.f32 %v134, %v2073
    %v2173 = vsub.f32 %v135, %v2075
    %v2174 = vsub.f32 %v136, %v2076
    %v2175 = vsub.f32 %v137, %v2078
    %v2176 = vsub.f32 %v138, %v2079
    %v2177 = vsub.f32 %v139, %v2081
    %v2178 = vand.u32 2147483647, %v2130
    %v2179 = vand.u32 2147483647, %v2131
    %v2180 = vand.u32 2147483647, %v2132
    %v2181 = vand.u32 2147483647, %v2133
    %v2182 = vand.u32 2147483647, %v2134
    %v2183 = vand.u32 2147483647, %v2135
    %v2184 = vand.u32 2147483647, %v2136
    %v2185 = vand.u32 2147483647, %v2137
    %v2186 = vand.u32 2147483647, %v2138
    %v2187 = vand.u32 2147483647, %v2139
    %v2188 = vand.u32 2147483647, %v2140
    %v2189 = vand.u32 2147483647, %v2141
    %v2190 = vand.u32 2147483647, %v2142
    %v2191 = vand.u32 2147483647, %v2143
    %v2192 = vand.u32 2147483647, %v2144
    %v2193 = vand.u32 2147483647, %v2145
    %v2194 = vand.u32 2147483647, %v2146
    %v2195 = vand.u32 2147483647, %v2147
    %v2196 = vand.u32 2147483647, %v2148
    %v2197 = vand.u32 2147483647, %v2149
    %v2198 = vand.u32 2147483647, %v2150
    %v2199 = vand.u32 2147483647, %v2151
    %v2200 = vand.u32 2147483647, %v2152
    %v2201 = vand.u32 2147483647, %v2153
    %v2202 = vand.u32 2147483647, %v2154
    %v2203 = vand.u32 2147483647, %v2155
    %v2204 = vand.u32 2147483647, %v2156
    %v2205 = vand.u32 2147483647, %v2157
    %v2206 = vand.u32 2147483647, %v2158
    %v2207 = vand.u32 2147483647, %v2159
    %v2208 = vand.u32 2147483647, %v2160
    %v2209 = vand.u32 2147483647, %v2161
    %v2210 = vand.u32 2147483647, %v2162
    %v2211 = vand.u32 2147483647, %v2163
    %v2212 = vand.u32 2147483647, %v2164
    %v2213 = vand.u32 2147483647, %v2165
    %v2214 = vand.u32 2147483647, %v2166
    %v2215 = vand.u32 2147483647, %v2167
    %v2216 = vand.u32 2147483647, %v2168
    %v2217 = vand.u32 2147483647, %v2169
    %v2218 = vand.u32 2147483647, %v2170
    %v2219 = vand.u32 2147483647, %v2171
    %v2220 = vand.u32 2147483647, %v2172
    %v2221 = vand.u32 2147483647, %v2173
    %v2222 = vand.u32 2147483647, %v2174
    %v2223 = vand.u32 2147483647, %v2175
    %v2224 = vand.u32 2147483647, %v2176
    %v2225 = vand.u32 2147483647, %v2177
    %v2226 = vsub.f32 %v2178, %v1962
    %v2227 = vsub.f32 %v2179, %v1963
    %v2228 = vsub.f32 %v2180, %v1964
    %v2229 = vsub.f32 %v2181, %v1965
    %v2230 = vsub.f32 %v2182, %v1966
    %v2231 = vsub.f32 %v2183, %v1967
    %v2232 = vsub.f32 %v2184, %v1968
    %v2233 = vsub.f32 %v2185, %v1969
    %v2234 = vsub.f32 %v2186, %v1970
    %v2235 = vsub.f32 %v2187, %v1971
    %v2236 = vsub.f32 %v2188, %v1972
    %v2237 = vsub.f32 %v2189, %v1973
    %v2238 = vsub.f32 %v2190, %v1974
    %v2239 = vsub.f32 %v2191, %v1975
    %v2240 = vsub.f32 %v2192, %v1976
    %v2241 = vsub.f32 %v2193, %v1977
    %v2242 = vsub.f32 %v2194, %v1978
    %v2243 = vsub.f32 %v2195, %v1979
    %v2244 = vsub.f32 %v2196, %v1980
    %v2245 = vsub.f32 %v2197, %v1981
    %v2246 = vsub.f32 %v2198, %v1982
    %v2247 = vsub.f32 %v2199, %v1983
    %v2248 = vsub.f32 %v2200, %v1984
    %v2249 = vsub.f32 %v2201, %v1985
    %v2250 = vsub.f32 %v2202, %v1986
    %v2251 = vsub.f32 %v2203, %v1987
    %v2252 = vsub.f32 %v2204, %v1988
    %v2253 = vsub.f32 %v2205, %v1989
    %v2254 = vsub.f32 %v2206, %v1990
    %v2255 = vsub.f32 %v2207, %v1991
    %v2256 = vsub.f32 %v2208, %v1992
    %v2257 = vsub.f32 %v2209, %v1993
    %v2258 = vsub.f32 %v2210, %v1994
    %v2259 = vsub.f32 %v2211, %v1995
    %v2260 = vsub.f32 %v2212, %v1996
    %v2261 = vsub.f32 %v2213, %v1997
    %v2262 = vsub.f32 %v2214, %v1998
    %v2263 = vsub.f32 %v2215, %v1999
    %v2264 = vsub.f32 %v2216, %v2000
    %v2265 = vsub.f32 %v2217, %v2001
    %v2266 = vsub.f32 %v2218, %v2002
    %v2267 = vsub.f32 %v2219, %v2003
    %v2268 = vsub.f32 %v2220, %v2004
    %v2269 = vsub.f32 %v2221, %v2005
    %v2270 = vsub.f32 %v2222, %v2006
    %v2271 = vsub.f32 %v2223, %v2007
    %v2272 = vsub.f32 %v2224, %v2008
    %v2273 = vsub.f32 %v2225, %v2009
    %v2274 = vand.u32 2147483647, %v2226
    %v2275 = vand.u32 2147483647, %v2227
    %v2276 = vand.u32 2147483647, %v2228
    %v2277 = vand.u32 2147483647, %v2229
    %v2278 = vand.u32 2147483647, %v2230
    %v2279 = vand.u32 2147483647, %v2231
    %v2280 = vand.u32 2147483647, %v2232
    %v2281 = vand.u32 2147483647, %v2233
    %v2282 = vand.u32 2147483647, %v2234
    %v2283 = vand.u32 2147483647, %v2235
    %v2284 = vand.u32 2147483647, %v2236
    %v2285 = vand.u32 2147483647, %v2237
    %v2286 = vand.u32 2147483647, %v2238
    %v2287 = vand.u32 2147483647, %v2239
    %v2288 = vand.u32 2147483647, %v2240
    %v2289 = vand.u32 2147483647, %v2241
    %v2290 = vand.u32 2147483647, %v2242
    %v2291 = vand.u32 2147483647, %v2243
    %v2292 = vand.u32 2147483647, %v2244
    %v2293 = vand.u32 2147483647, %v2245
    %v2294 = vand.u32 2147483647, %v2246
    %v2295 = vand.u32 2147483647, %v2247
    %v2296 = vand.u32 2147483647, %v2248
    %v2297 = vand.u32 2147483647, %v2249
    %v2298 = vand.u32 2147483647, %v2250
    %v2299 = vand.u32 2147483647, %v2251
    %v2300 = vand.u32 2147483647, %v2252
    %v2301 = vand.u32 2147483647, %v2253
    %v2302 = vand.u32 2147483647, %v2254
    %v2303 = vand.u32 2147483647, %v2255
    %v2304 = vand.u32 2147483647, %v2256
    %v2305 = vand.u32 2147483647, %v2257
    %v2306 = vand.u32 2147483647, %v2258
    %v2307 = vand.u32 2147483647, %v2259
    %v2308 = vand.u32 2147483647, %v2260
    %v2309 = vand.u32 2147483647, %v2261
    %v2310 = vand.u32 2147483647, %v2262
    %v2311 = vand.u32 2147483647, %v2263
    %v2312 = vand.u32 2147483647, %v2264
    %v2313 = vand.u32 2147483647, %v2265
    %v2314 = vand.u32 2147483647, %v2266
    %v2315 = vand.u32 2147483647, %v2267
    %v2316 = vand.u32 2147483647, %v2268
    %v2317 = vand.u32 2147483647, %v2269
    %v2318 = vand.u32 2147483647, %v2270
    %v2319 = vand.u32 2147483647, %v2271
    %v2320 = vand.u32 2147483647, %v2272
    %v2321 = vand.u32 2147483647, %v2273
    %v2322 = vsel %vm885, %v2274, 0.0
    %v2323 = vsel %vm885, %v2275, 0.0
    %v2324 = vsel %vm886, %v2276, 0.0
    %v2325 = vsel %vm886, %v2277, 0.0
    %v2326 = vsel %vm887, %v2278, 0.0
    %v2327 = vsel %vm887, %v2279, 0.0
    %v2328 = vsel %vm888, %v2280, 0.0
    %v2329 = vsel %vm888, %v2281, 0.0
    %v2330 = vsel %vm889, %v2282, 0.0
    %v2331 = vsel %vm889, %v2283, 0.0
    %v2332 = vsel %vm890, %v2284, 0.0
    %v2333 = vsel %vm890, %v2285, 0.0
    %v2334 = vsel %vm891, %v2286, 0.0
    %v2335 = vsel %vm891, %v2287, 0.0
    %v2336 = vsel %vm892, %v2288, 0.0
    %v2337 = vsel %vm892, %v2289, 0.0
    %v2338 = vsel %vm893, %v2290, 0.0
    %v2339 = vsel %vm893, %v2291, 0.0
    %v2340 = vsel %vm894, %v2292, 0.0
    %v2341 = vsel %vm894, %v2293, 0.0
    %v2342 = vsel %vm895, %v2294, 0.0
    %v2343 = vsel %vm895, %v2295, 0.0
    %v2344 = vsel %vm896, %v2296, 0.0
    %v2345 = vsel %vm896, %v2297, 0.0
    %v2346 = vsel %vm897, %v2298, 0.0
    %v2347 = vsel %vm897, %v2299, 0.0
    %v2348 = vsel %vm898, %v2300, 0.0
    %v2349 = vsel %vm898, %v2301, 0.0
    %v2350 = vsel %vm899, %v2302, 0.0
    %v2351 = vsel %vm899, %v2303, 0.0
    %v2352 = vsel %vm900, %v2304, 0.0
    %v2353 = vsel %vm900, %v2305, 0.0
    %v2354 = vsel %vm901, %v2306, 0.0
    %v2355 = vsel %vm901, %v2307, 0.0
    %v2356 = vsel %vm902, %v2308, 0.0
    %v2357 = vsel %vm902, %v2309, 0.0
    %v2358 = vsel %vm903, %v2310, 0.0
    %v2359 = vsel %vm903, %v2311, 0.0
    %v2360 = vsel %vm904, %v2312, 0.0
    %v2361 = vsel %vm904, %v2313, 0.0
    %v2362 = vsel %vm905, %v2314, 0.0
    %v2363 = vsel %vm905, %v2315, 0.0
    %v2364 = vsel %vm906, %v2316, 0.0
    %v2365 = vsel %vm906, %v2317, 0.0
    %v2366 = vsel %vm907, %v2318, 0.0
    %v2367 = vsel %vm907, %v2319, 0.0
    %v2368 = vsel %vm908, %v2320, 0.0
    %v2369 = vsel %vm908, %v2321, 0.0
    %vm2418 = vcmask 1046528
    %v2419 = vrot.slane %v2322, 1
    %v2420 = vrot.slane %v2323, 1
    %v2421 = vsel %vm2418, %v2419, %v2420
    %v2422 = vrot.slane %v2324, 1
    %v2423 = vrot.slane %v2325, 1
    %v2424 = vsel %vm2418, %v2422, %v2423
    %v2425 = vrot.slane %v2326, 1
    %v2426 = vrot.slane %v2327, 1
    %v2427 = vsel %vm2418, %v2425, %v2426
    %v2428 = vrot.slane %v2328, 1
    %v2429 = vrot.slane %v2329, 1
    %v2430 = vsel %vm2418, %v2428, %v2429
    %v2431 = vrot.slane %v2330, 1
    %v2432 = vrot.slane %v2331, 1
    %v2433 = vsel %vm2418, %v2431, %v2432
    %v2434 = vrot.slane %v2332, 1
    %v2435 = vrot.slane %v2333, 1
    %v2436 = vsel %vm2418, %v2434, %v2435
    %v2437 = vrot.slane %v2334, 1
    %v2438 = vrot.slane %v2335, 1
    %v2439 = vsel %vm2418, %v2437, %v2438
    %v2440 = vrot.slane %v2336, 1
    %v2441 = vrot.slane %v2337, 1
    %v2442 = vsel %vm2418, %v2440, %v2441
    %v2443 = vrot.slane %v2338, 1
    %v2444 = vrot.slane %v2339, 1
    %v2445 = vsel %vm2418, %v2443, %v2444
    %v2446 = vrot.slane %v2340, 1
    %v2447 = vrot.slane %v2341, 1
    %v2448 = vsel %vm2418, %v2446, %v2447
    %v2449 = vrot.slane %v2342, 1
    %v2450 = vrot.slane %v2343, 1
    %v2451 = vsel %vm2418, %v2449, %v2450
    %v2452 = vrot.slane %v2344, 1
    %v2453 = vrot.slane %v2345, 1
    %v2454 = vsel %vm2418, %v2452, %v2453
    %v2455 = vrot.slane %v2346, 1
    %v2456 = vrot.slane %v2347, 1
    %v2457 = vsel %vm2418, %v2455, %v2456
    %v2458 = vrot.slane %v2348, 1
    %v2459 = vrot.slane %v2349, 1
    %v2460 = vsel %vm2418, %v2458, %v2459
    %v2461 = vrot.slane %v2350, 1
    %v2462 = vrot.slane %v2351, 1
    %v2463 = vsel %vm2418, %v2461, %v2462
    %v2464 = vrot.slane %v2352, 1
    %v2465 = vrot.slane %v2353, 1
    %v2466 = vsel %vm2418, %v2464, %v2465
    %v2467 = vrot.slane %v2354, 1
    %v2468 = vrot.slane %v2355, 1
    %v2469 = vsel %vm2418, %v2467, %v2468
    %v2470 = vrot.slane %v2356, 1
    %v2471 = vrot.slane %v2357, 1
    %v2472 = vsel %vm2418, %v2470, %v2471
    %v2473 = vrot.slane %v2358, 1
    %v2474 = vrot.slane %v2359, 1
    %v2475 = vsel %vm2418, %v2473, %v2474
    %v2476 = vrot.slane %v2360, 1
    %v2477 = vrot.slane %v2361, 1
    %v2478 = vsel %vm2418, %v2476, %v2477
    %v2479 = vrot.slane %v2362, 1
    %v2480 = vrot.slane %v2363, 1
    %v2481 = vsel %vm2418, %v2479, %v2480
    %v2482 = vrot.slane %v2364, 1
    %v2483 = vrot.slane %v2365, 1
    %v2484 = vsel %vm2418, %v2482, %v2483
    %v2485 = vrot.slane %v2366, 1
    %v2486 = vrot.slane %v2367, 1
    %v2487 = vsel %vm2418, %v2485, %v2486
    %v2488 = vrot.slane %v2368, 1
    %v2489 = vrot.slane %v2369, 1
    %v2490 = vsel %vm2418, %v2488, %v2489
    %vm2539 = vcmask 130048
    %v2540 = vsel %vm2539, %v2421, 0.0
    %vm2541 = vcmask 129024
    %v2542 = vsel %vm2541, %v2420, 0.0
    %v2543 = vadd.f32 %v2540, %v2542
    %v2544 = vsel %vm2539, %v2424, 0.0
    %v2545 = vadd.f32 %v2543, %v2544
    %v2546 = vsel %vm2541, %v2423, 0.0
    %v2547 = vadd.f32 %v2545, %v2546
    %v2548 = vsel %vm2539, %v2427, 0.0
    %v2549 = vadd.f32 %v2547, %v2548
    %v2550 = vsel %vm2541, %v2426, 0.0
    %v2551 = vadd.f32 %v2549, %v2550
    %v2552 = vsel %vm2539, %v2430, 0.0
    %v2553 = vadd.f32 %v2551, %v2552
    %v2554 = vsel %vm2541, %v2429, 0.0
    %v2555 = vadd.f32 %v2553, %v2554
    %v2556 = vsel %vm2539, %v2433, 0.0
    %v2557 = vadd.f32 %v2555, %v2556
    %v2558 = vsel %vm2541, %v2432, 0.0
    %v2559 = vadd.f32 %v2557, %v2558
    %v2560 = vsel %vm2539, %v2436, 0.0
    %v2561 = vadd.f32 %v2559, %v2560
    %v2562 = vsel %vm2541, %v2435, 0.0
    %v2563 = vadd.f32 %v2561, %v2562
    %v2564 = vsel %vm2539, %v2439, 0.0
    %v2565 = vadd.f32 %v2563, %v2564
    %v2566 = vsel %vm2541, %v2438, 0.0
    %v2567 = vadd.f32 %v2565, %v2566
    %v2568 = vsel %vm2539, %v2442, 0.0
    %v2569 = vadd.f32 %v2567, %v2568
    %v2570 = vsel %vm2541, %v2441, 0.0
    %v2571 = vadd.f32 %v2569, %v2570
    %v2572 = vsel %vm2539, %v2445, 0.0
    %v2573 = vadd.f32 %v2571, %v2572
    %v2574 = vsel %vm2541, %v2444, 0.0
    %v2575 = vadd.f32 %v2573, %v2574
    %v2576 = vsel %vm2539, %v2448, 0.0
    %v2577 = vadd.f32 %v2575, %v2576
    %v2578 = vsel %vm2541, %v2447, 0.0
    %v2579 = vadd.f32 %v2577, %v2578
    %v2580 = vsel %vm2539, %v2451, 0.0
    %v2581 = vadd.f32 %v2579, %v2580
    %v2582 = vsel %vm2541, %v2450, 0.0
    %v2583 = vadd.f32 %v2581, %v2582
    %v2584 = vsel %vm2539, %v2454, 0.0
    %v2585 = vadd.f32 %v2583, %v2584
    %v2586 = vsel %vm2541, %v2453, 0.0
    %v2587 = vadd.f32 %v2585, %v2586
    %v2588 = vsel %vm2539, %v2457, 0.0
    %v2589 = vadd.f32 %v2587, %v2588
    %v2590 = vsel %vm2541, %v2456, 0.0
    %v2591 = vadd.f32 %v2589, %v2590
    %v2592 = vsel %vm2539, %v2460, 0.0
    %v2593 = vadd.f32 %v2591, %v2592
    %v2594 = vsel %vm2541, %v2459, 0.0
    %v2595 = vadd.f32 %v2593, %v2594
    %v2596 = vsel %vm2539, %v2463, 0.0
    %v2597 = vadd.f32 %v2595, %v2596
    %v2598 = vsel %vm2541, %v2462, 0.0
    %v2599 = vadd.f32 %v2597, %v2598
    %v2600 = vsel %vm2539, %v2466, 0.0
    %v2601 = vadd.f32 %v2599, %v2600
    %v2602 = vsel %vm2541, %v2465, 0.0
    %v2603 = vadd.f32 %v2601, %v2602
    %v2604 = vsel %vm2539, %v2469, 0.0
    %v2605 = vadd.f32 %v2603, %v2604
    %v2606 = vsel %vm2541, %v2468, 0.0
    %v2607 = vadd.f32 %v2605, %v2606
    %v2608 = vsel %vm2539, %v2472, 0.0
    %v2609 = vadd.f32 %v2607, %v2608
    %v2610 = vsel %vm2541, %v2471, 0.0
    %v2611 = vadd.f32 %v2609, %v2610
    %v2612 = vsel %vm2539, %v2475, 0.0
    %v2613 = vadd.f32 %v2611, %v2612
    %v2614 = vsel %vm2541, %v2474, 0.0
    %v2615 = vadd.f32 %v2613, %v2614
    %v2616 = vsel %vm2539, %v2478, 0.0
    %v2617 = vadd.f32 %v2615, %v2616
    %v2618 = vsel %vm2541, %v2477, 0.0
    %v2619 = vadd.f32 %v2617, %v2618
    %v2620 = vsel %vm2539, %v2481, 0.0
    %v2621 = vadd.f32 %v2619, %v2620
    %v2622 = vsel %vm2541, %v2480, 0.0
    %v2623 = vadd.f32 %v2621, %v2622
    %v2624 = vsel %vm2539, %v2484, 0.0
    %v2625 = vadd.f32 %v2623, %v2624
    %v2626 = vsel %vm2541, %v2483, 0.0
    %v2627 = vadd.f32 %v2625, %v2626
    %v2628 = vsel %vm2539, %v2487, 0.0
    %v2629 = vadd.f32 %v2627, %v2628
    %v2630 = vsel %vm2541, %v2486, 0.0
    %v2631 = vadd.f32 %v2629, %v2630
    %v2632 = vsel %vm2539, %v2490, 0.0
    %v2633 = vadd.f32 %v2631, %v2632
    %v2634 = vsel %vm2541, %v2489, 0.0
    %v2635 = vadd.f32 %v2633, %v2634
    %2636 = vadd.xlane.f32.xlu0 %v2635
    %v2637 = vpop.xlane.xlu0 %2636
    %v2638 = vrot.slane %v2637, 4
    %v2639 = vadd.f32 %v2637, %v2638
    %v2640 = vrot.slane %v2639, 2
    %v2641 = vadd.f32 %v2639, %v2640
    %v2642 = vrot.slane %v2641, 1
    %v2643 = vadd.f32 %v2641, %v2642
    %s2644 = vtos %v2643
    %s2645 = sadd.f32 %s1792, %s2644
    %v2646 = vrot.slane %v1448, 7
    %v2647 = vrot.slane %v1450, 7
    %v2648 = vrot.slane %v1452, 7
    %v2649 = vrot.slane %v1454, 7
    %v2650 = vrot.slane %v1456, 7
    %v2651 = vrot.slane %v1458, 7
    %v2652 = vrot.slane %v1460, 7
    %v2653 = vrot.slane %v1462, 7
    %v2654 = vrot.slane %v1464, 7
    %v2655 = vrot.slane %v1466, 7
    %v2656 = vrot.slane %v1468, 7
    %v2657 = vrot.slane %v1470, 7
    %v2658 = vrot.slane %v1472, 7
    %v2659 = vrot.slane %v1474, 7
    %v2660 = vrot.slane %v1476, 7
    %v2661 = vrot.slane %v1478, 7
    %v2662 = vrot.slane %v1480, 7
    %v2663 = vrot.slane %v1482, 7
    %v2664 = vrot.slane %v1484, 7
    %v2665 = vrot.slane %v1486, 7
    %v2666 = vrot.slane %v1488, 7
    %v2667 = vrot.slane %v1490, 7
    %v2668 = vrot.slane %v1492, 7
    %v2669 = vrot.slane %v1494, 7
    %vm2694 = vcmask 122880
    %v2695 = vsel %vm2694, %v2646, 0.0
    %v2696 = vsel %vm2694, %v2647, 0.0
    %v2697 = vadd.f32 %v2695, %v2696
    %v2698 = vsel %vm2694, %v2648, 0.0
    %v2699 = vadd.f32 %v2697, %v2698
    %v2700 = vsel %vm2694, %v2649, 0.0
    %v2701 = vadd.f32 %v2699, %v2700
    %v2702 = vsel %vm2694, %v2650, 0.0
    %v2703 = vadd.f32 %v2701, %v2702
    %v2704 = vsel %vm2694, %v2651, 0.0
    %v2705 = vadd.f32 %v2703, %v2704
    %v2706 = vsel %vm2694, %v2652, 0.0
    %v2707 = vadd.f32 %v2705, %v2706
    %v2708 = vsel %vm2694, %v2653, 0.0
    %v2709 = vadd.f32 %v2707, %v2708
    %v2710 = vsel %vm2694, %v2654, 0.0
    %v2711 = vadd.f32 %v2709, %v2710
    %v2712 = vsel %vm2694, %v2655, 0.0
    %v2713 = vadd.f32 %v2711, %v2712
    %v2714 = vsel %vm2694, %v2656, 0.0
    %v2715 = vadd.f32 %v2713, %v2714
    %v2716 = vsel %vm2694, %v2657, 0.0
    %v2717 = vadd.f32 %v2715, %v2716
    %v2718 = vsel %vm2694, %v2658, 0.0
    %v2719 = vadd.f32 %v2717, %v2718
    %v2720 = vsel %vm2694, %v2659, 0.0
    %v2721 = vadd.f32 %v2719, %v2720
    %v2722 = vsel %vm2694, %v2660, 0.0
    %v2723 = vadd.f32 %v2721, %v2722
    %v2724 = vsel %vm2694, %v2661, 0.0
    %v2725 = vadd.f32 %v2723, %v2724
    %v2726 = vsel %vm2694, %v2662, 0.0
    %v2727 = vadd.f32 %v2725, %v2726
    %v2728 = vsel %vm2694, %v2663, 0.0
    %v2729 = vadd.f32 %v2727, %v2728
    %v2730 = vsel %vm2694, %v2664, 0.0
    %v2731 = vadd.f32 %v2729, %v2730
    %v2732 = vsel %vm2694, %v2665, 0.0
    %v2733 = vadd.f32 %v2731, %v2732
    %v2734 = vsel %vm2694, %v2666, 0.0
    %v2735 = vadd.f32 %v2733, %v2734
    %v2736 = vsel %vm2694, %v2667, 0.0
    %v2737 = vadd.f32 %v2735, %v2736
    %v2738 = vsel %vm2694, %v2668, 0.0
    %v2739 = vadd.f32 %v2737, %v2738
    %v2740 = vsel %vm2694, %v2669, 0.0
    %v2741 = vadd.f32 %v2739, %v2740
    %2742 = vadd.xlane.f32.xlu0 %v2741
    %v2743 = vpop.xlane.xlu0 %2742
    %v2744 = vrot.slane %v2743, 4
    %v2745 = vadd.f32 %v2743, %v2744
    %v2746 = vrot.slane %v2745, 2
    %v2747 = vadd.f32 %v2745, %v2746
    %v2748 = vrot.slane %v2747, 1
    %v2749 = vadd.f32 %v2747, %v2748
    %s2750 = vtos %v2749
    %s2751 = sadd.f32 %s2645, %s2750
    %s2752 = scalar_lea.smem [#allocation7], 0
    %2753 = sst [smem:[%s2752]] %s2751
    // Predicated region
    $region18: #{gradient_loss.1} parent=1 // pred_check
      _
    $region19: #{gradient_loss.1} parent=1 // pred_check_branch
      %2755 = sbr.rel (0) target = $region21
    $region20: #{gradient_loss.1} parent=1 // pred_region
      %2757 = vsyncadd [#allocation4], 0
      %s2759 = sshll.u32 %s2, 4
      %s2760 = int_to_ptr.hbm [resolvable:$true] %s2759
      %2762 = dma.smem_to_hbm [#allocation7], 16, %s2760, [#allocation4]
    $region21: #{gradient_loss.1} parent=1 // pred_fallthru
      _
    // Predicated region
    $region22: #{gradient_loss.1} parent=1 // pred_check
      _
    $region23: #{gradient_loss.1} parent=1 // pred_check_branch
      %2764 = sbr.rel (0) target = $region25
    $region24: #{gradient_loss.1} parent=1 // pred_region
      %2766 = dma.done [#allocation4], 16
    $region25: #{gradient_loss.1} parent=1 // pred_fallthru
      _
    %2767 = sfence
    %2768 = vsyncpa [#allocation3], 1
    %2769 = vsyncpa [#allocation6], 1
    %2770 = vsyncpa [#allocation4], 1

</llo_original>
